<compile_context>
chip_gen: v7x
topology: tpu7x:2x2x1
jax: 0.10.0
libtpu: 0.0.40
codegen_flags: <defaults>
</compile_context>

<pallas_src>
import functools

import jax
import jax.numpy as jnp
import numpy as np
from jax import lax
from jax.experimental import pallas as pl
from jax.experimental.pallas import tpu as pltpu


# -----------------------------------------------------------------------------
# Helpers
# -----------------------------------------------------------------------------
def _round_up(v, m):
    return ((v + m - 1) // m) * m


def _vmem_limit_bytes():
    """Generation-aware VMEM budget with headroom for Mosaic internal scratch."""
    try:
        cap = int(pltpu.get_tpu_info().vmem_capacity_bytes)
        return int(min(cap * 3 // 4, 96 * 1024 * 1024))
    except Exception:
        return 48 * 1024 * 1024


def _const_spec(shape):
    """Grid-invariant operand: single-buffered (falls back if unsupported)."""
    try:
        return pl.BlockSpec(shape, lambda b, c: (0, 0),
                            pipeline_mode=pl.Buffered(1))
    except TypeError:
        return pl.BlockSpec(shape, lambda b, c: (0, 0))


# -----------------------------------------------------------------------------
# Recurrent kernel: consumes precomputed input gates gi, carries h in VMEM
# scratch, writes the current hidden state to the (resident) output block.
# -----------------------------------------------------------------------------
def _gru_recurrent_kernel(gi_ref, w_hh_ref, b_hh_n_ref, h_out_ref, h_scratch,
                          *, hidden_pad, t_chunk, hoist_w, compute_dtype):
    c = pl.program_id(1)                       # time-chunk index
    Hp = hidden_pad
    Bb = h_scratch.shape[0]

    @pl.when(c == 0)
    def _():
        h_scratch[...] = jnp.zeros_like(h_scratch)

    # Hoisted once per grid step (outside the unrolled loop).
    b_hh_n = jnp.broadcast_to(b_hh_n_ref[...].astype(jnp.float32), (Bb, Hp))
    w_hh_hoisted = w_hh_ref[...] if hoist_w else None

    def step(i, h):
        # For large Hp, let each dot read the ref (bounds vreg pressure).
        w_hh = w_hh_hoisted if hoist_w else w_hh_ref[...]
        gi = gi_ref[i]                                        # (Bb, 3Hp)
        gh = jnp.dot(h.astype(compute_dtype), w_hh,
                     preferred_element_type=jnp.float32)      # (Bb, 3Hp) f32
        # Lane-aligned per-gate slices (Hp is a multiple of 128).
        i_r = gi[:, 0:Hp].astype(jnp.float32)
        i_z = gi[:, Hp:2 * Hp].astype(jnp.float32)
        i_n = gi[:, 2 * Hp:3 * Hp].astype(jnp.float32)
        r = jax.nn.sigmoid(i_r + gh[:, 0:Hp])
        z = jax.nn.sigmoid(i_z + gh[:, Hp:2 * Hp])
        n = jnp.tanh(i_n + r * (gh[:, 2 * Hp:3 * Hp] + b_hh_n))
        return (1.0 - z) * n + z * h

    h = lax.fori_loop(0, t_chunk, step, h_scratch[...],
                      unroll=min(t_chunk, 8))
    h_scratch[...] = h
    # Output block is resident across the time axis; write every step so the
    # eventual writeback is deterministic (only the last write survives).
    h_out_ref[...] = h.astype(h_out_ref.dtype)


# -----------------------------------------------------------------------------
# Wrapper
# -----------------------------------------------------------------------------
def simple_gru_forward(x, params, *, compute_dtype=jnp.float32,
                       max_time_chunk=128):
    """x: (B, T, I) float32, batch_first (PyTorch convention). Returns (B, O)."""
    B, T, I = x.shape
    H = params["w_hh"].shape[1]
    f32 = jnp.float32

    Hp = _round_up(H, 128)                  # lane-aligned hidden (per gate)
    Bp = _round_up(B, 8)                    # sublane-aligned batch
    if Bp >= 16:                            # split batch across 2 blocks (v7x: 2 TCs)
        Bp = _round_up(Bp, 16)
        nb, Bb = 2, Bp // 2
    else:
        nb, Bb = 1, Bp

    w_ih = params["w_ih"].astype(f32)       # (3H, I)
    w_hh = params["w_hh"].astype(f32)       # (3H, H)
    b_ih = params["b_ih"].astype(f32)       # (3H,)
    b_hh = params["b_hh"].astype(f32)       # (3H,)

    # Per-gate, lane-aligned weight layouts: gate g occupies cols [g*Hp,(g+1)*Hp).
    w_ih_t = jnp.concatenate(
        [jnp.pad(w_ih[g * H:(g + 1) * H, :].T, ((0, 0), (0, Hp - H)))
         for g in range(3)], axis=1)                               # (I, 3Hp)
    w_hh_t = jnp.concatenate(
        [jnp.pad(w_hh[g * H:(g + 1) * H, :].T, ((0, Hp - H), (0, Hp - H)))
         for g in range(3)], axis=1)                               # (Hp, 3Hp)

    def pad_bias(b):                                               # (H,) -> (1, Hp)
        return jnp.pad(b, (0, Hp - H))[None, :]

    b_ih_g = [pad_bias(b_ih[g * H:(g + 1) * H]) for g in range(3)]
    b_hh_g = [pad_bias(b_hh[g * H:(g + 1) * H]) for g in range(3)]
    # Fold b_ih (all gates) + b_hh (r,z) into gi; only the n-gate b_hh stays
    # inside the recurrence (added before the r * h_n product).
    gi_bias = jnp.concatenate(
        [b_ih_g[0] + b_hh_g[0], b_ih_g[1] + b_hh_g[1], b_ih_g[2]], axis=1)
    b_hh_n = b_hh_g[2]                                             # (1, Hp) f32

    # ---- Input projection for ALL timesteps: one large MXU matmul ----------
    x_p = jnp.pad(x.astype(f32), ((0, Bp - B), (0, 0), (0, 0)))    # (Bp, T, I)
    gi_all = (jnp.einsum("bti,ig->tbg", x_p, w_ih_t,
                         preferred_element_type=f32)
              + gi_bias[None, :, :]).astype(compute_dtype)         # (T, Bp, 3Hp)
    w_hh_c = w_hh_t.astype(compute_dtype)

    # ---- VMEM-budget-derived time chunk ------------------------------------
    vmem_limit = _vmem_limit_bytes()
    gi_item = jnp.dtype(compute_dtype).itemsize
    resident = (Hp * 3 * Hp * gi_item        # W_hh^T (single-buffered)
                + Hp * 4                     # b_hh (n gate)
                + Bb * Hp * 4                # h scratch
                + 2 * Bb * Hp * 4)           # double-buffered h output
    margin = 4 * 1024 * 1024
    avail = max(vmem_limit - resident - margin, 0)
    per_step = 2 * Bb * 3 * Hp * gi_item     # double-buffered gi per timestep
    Tc = int(max(1, min(max_time_chunk, T, avail // per_step)))

    # Pad time so T_pad % Tc == 0.  Padded steps are exact identity updates:
    # z-gate preactivation = +1e6 -> z == 1 -> h_new == h; r/n columns are 0.
    T_pad = _round_up(T, Tc)
    if T_pad > T:
        pad = jnp.zeros((T_pad - T, Bp, 3 * Hp), compute_dtype)
        pad = pad.at[:, :, Hp:2 * Hp].set(jnp.asarray(1e6, compute_dtype))
        gi_all = jnp.concatenate([gi_all, pad], axis=0)
    nt = T_pad // Tc

    kernel = functools.partial(_gru_recurrent_kernel,
                               hidden_pad=Hp, t_chunk=Tc,
                               hoist_w=(Hp < 256),
                               compute_dtype=compute_dtype)

    grid_spec = pltpu.PrefetchScalarGridSpec(
        num_scalar_prefetch=0,
        grid=(nb, nt),                                             # batch, time
        in_specs=[
            pl.BlockSpec((Tc, Bb, 3 * Hp), lambda b, c: (c, b, 0)),  # gi chunk
            _const_spec((Hp, 3 * Hp)),                               # W_hh^T
            _const_spec((1, Hp)),                                    # b_hh (n)
        ],
        out_specs=pl.BlockSpec((Bb, Hp), lambda b, c: (b, 0)),       # final h
        scratch_shapes=[pltpu.VMEM((Bb, Hp), jnp.float32)],          # hidden state
    )

    h_final = pl.pallas_call(
        kernel,
        out_shape=jax.ShapeDtypeStruct((Bp, Hp), jnp.float32),
        grid_spec=grid_spec,
        compiler_params=pltpu.CompilerParams(
            dimension_semantics=("parallel", "arbitrary"),
            vmem_limit_bytes=vmem_limit),
    )(gi_all, w_hh_c, b_hh_n)

    # Final FC (last-timestep hidden) runs in XLA, outside the recurrence.
    h = h_final[:B, :H]
    return h @ params["w_fc"].astype(f32).T + params["b_fc"].astype(f32)


# -----------------------------------------------------------------------------
# Parameter init (PyTorch layout / U(-1/sqrt(H), 1/sqrt(H))) and reference
# -----------------------------------------------------------------------------
def init_params(key, input_size, hidden_size, output_size):
    k = 1.0 / np.sqrt(hidden_size)
    keys = jax.random.split(key, 6)

    def u(kk, shape):
        return jax.random.uniform(kk, shape, minval=-k, maxval=k,
                                  dtype=jnp.float32)

    return {
        "w_ih": u(keys[0], (3 * hidden_size, input_size)),
        "w_hh": u(keys[1], (3 * hidden_size, hidden_size)),
        "b_ih": u(keys[2], (3 * hidden_size,)),
        "b_hh": u(keys[3], (3 * hidden_size,)),
        "w_fc": u(keys[4], (output_size, hidden_size)),
        "b_fc": u(keys[5], (output_size,)),
    }


def _reference_forward(x, params):
    """Pure-JAX GRU reference (PyTorch nn.GRU semantics)."""
    B, T, _ = x.shape
    H = params["w_hh"].shape[1]
    w_ih_t, w_hh_t = params["w_ih"].T, params["w_hh"].T
    h = jnp.zeros((B, H), jnp.float32)
    for t in range(T):
        gi = x[:, t, :] @ w_ih_t + params["b_ih"]
        gh = h @ w_hh_t + params["b_hh"]
        i_r, i_z, i_n = gi[:, :H], gi[:, H:2 * H], gi[:, 2 * H:]
        h_r, h_z, h_n = gh[:, :H], gh[:, H:2 * H], gh[:, 2 * H:]
        r = jax.nn.sigmoid(i_r + h_r)
        z = jax.nn.sigmoid(i_z + h_z)
        n = jnp.tanh(i_n + r * h_n)
        h = (1.0 - z) * n + z * h
    return h @ params["w_fc"].T + params["b_fc"]


if __name__ == "__main__":
    batch, seq, input_size, hidden_size, output_size = 2, 8, 4, 32, 8

    key = jax.random.PRNGKey(0)
    kx, kp = jax.random.split(key)
    x = jax.random.normal(kx, (batch, seq, input_size), dtype=jnp.float32)
    params = init_params(kp, input_size, hidden_size, output_size)
    ref = _reference_forward(x, params)

    # f32 path (bit-tight vs. reference).
    out_f32 = jax.block_until_ready(simple_gru_forward(x, params))
    np.testing.assert_allclose(np.asarray(out_f32), np.asarray(ref),
                               rtol=1e-5, atol=1e-5)

    # bf16 gi / bf16 recurrent-matmul path (gate math stays f32).
    out_bf16 = jax.block_until_ready(
        simple_gru_forward(x, params, compute_dtype=jnp.bfloat16))
    np.testing.assert_allclose(np.asarray(out_bf16), np.asarray(ref),
                               rtol=5e-2, atol=5e-2)

    # Non-divisible T exercises the identity-padded time tail.
    x2 = jax.random.normal(jax.random.PRNGKey(1), (batch, 11, input_size),
                           dtype=jnp.float32)
    ref2 = _reference_forward(x2, params)
    out2 = jax.block_until_ready(
        simple_gru_forward(x2, params, max_time_chunk=4))
    np.testing.assert_allclose(np.asarray(out2), np.asarray(ref2),
                               rtol=1e-5, atol=1e-5)

    print("KERNEL_OK")
</pallas_src>

<mosaic_0001>
module attributes {stable_mosaic.version = 11 : i64} {
  func.func @_gru_recurrent_kernel(%arg0: i32, %arg1: i32, %arg2: memref<8x8x384xf32, #tpu.memory_space<vmem>>, %arg3: memref<128x384xf32, #tpu.memory_space<vmem>>, %arg4: memref<1x128xf32, #tpu.memory_space<vmem>>, %arg5: memref<8x128xf32, #tpu.memory_space<vmem>>, %arg6: memref<8x128xf32, #tpu.memory_space<vmem>>) attributes {dimension_semantics = [#tpu.dimension_semantics<parallel>, #tpu.dimension_semantics<arbitrary>], iteration_bounds = array<i64: 1, 1>, scalar_prefetch = 0 : i64, scratch_operands = 1 : i64, tpu.core_type = #tpu.core_type<tc>, window_params = [{transform_indices = @transform_0, window_bounds = array<i64: 8, 8, 384>}, {pipeline_mode = #tpu.pipeline_mode<synchronous>, transform_indices = @transform_1, window_bounds = array<i64: 128, 384>}, {pipeline_mode = #tpu.pipeline_mode<synchronous>, transform_indices = @transform_2, window_bounds = array<i64: 1, 128>}, {transform_indices = @transform_3, window_bounds = array<i64: 8, 128>}]} {
    %c0_i32 = arith.constant 0 : i32
    %0 = arith.cmpi eq, %arg1, %c0_i32 : i32
    %1 = arith.extui %0 : i1 to i32
    %c0_i32_0 = arith.constant 0 : i32
    %2 = arith.cmpi ne, %1, %c0_i32_0 : i32
    scf.if %2 {
      %cst_58 = arith.constant 0.000000e+00 : f32
      %258 = vector.broadcast %cst_58 : f32 to vector<8x128xf32>
      %c0_59 = arith.constant 0 : index
      %c0_60 = arith.constant 0 : index
      %259 = vector.load %arg6[%c0_59, %c0_60] : memref<8x128xf32, #tpu.memory_space<vmem>>, vector<8x128xf32>
      tpu.vector_store %arg6[%c0_59, %c0_60], %258 {strides = array<i32>} : memref<8x128xf32, #tpu.memory_space<vmem>>, vector<8x128xf32>,
    } else {
    }
    %c0 = arith.constant 0 : index
    %c0_1 = arith.constant 0 : index
    %3 = vector.load %arg4[%c0, %c0_1] : memref<1x128xf32, #tpu.memory_space<vmem>>, vector<1x128xf32>
    %4 = vector.shape_cast %3 : vector<1x128xf32> to vector<1x128xf32>
    %5 = vector.broadcast %4 : vector<1x128xf32> to vector<8x128xf32>
    %c0_2 = arith.constant 0 : index
    %c0_3 = arith.constant 0 : index
    %6 = vector.load %arg3[%c0_2, %c0_3] : memref<128x384xf32, #tpu.memory_space<vmem>>, vector<128x384xf32>
    %c0_4 = arith.constant 0 : index
    %c0_5 = arith.constant 0 : index
    %7 = vector.load %arg6[%c0_4, %c0_5] : memref<8x128xf32, #tpu.memory_space<vmem>>, vector<8x128xf32>
    %c0_i32_6 = arith.constant 0 : i32
    %8 = arith.index_cast %c0_i32_6 : i32 to index
    %c0_7 = arith.constant 0 : index
    %c0_8 = arith.constant 0 : index
    %9 = vector.load %arg2[%8, %c0_7, %c0_8] : memref<8x8x384xf32, #tpu.memory_space<vmem>>, vector<1x8x384xf32>
    %10 = vector.shape_cast %9 : vector<1x8x384xf32> to vector<8x384xf32>
    %cst = arith.constant dense<0.000000e+00> : vector<8x384xf32>
    %11 = tpu.matmul %7, %6, %cst {dimension_numbers = #tpu.dot_dimension_numbers<[1], [0], [0], [1], [0, 0, 1, 1], [], []>} : vector<8x128xf32>, vector<128x384xf32>, vector<8x384xf32> -> vector<8x384xf32>
    %12 = vector.extract_strided_slice %10 {offsets = [0, 0], sizes = [8, 128], strides = [1, 1]} : vector<8x384xf32> to vector<8x128xf32>
    %13 = vector.extract_strided_slice %10 {offsets = [0, 128], sizes = [8, 128], strides = [1, 1]} : vector<8x384xf32> to vector<8x128xf32>
    %14 = vector.extract_strided_slice %10 {offsets = [0, 256], sizes = [8, 128], strides = [1, 1]} : vector<8x384xf32> to vector<8x128xf32>
    %15 = vector.extract_strided_slice %11 {offsets = [0, 0], sizes = [8, 128], strides = [1, 1]} : vector<8x384xf32> to vector<8x128xf32>
    %16 = arith.addf %12, %15 : vector<8x128xf32>
    %17 = arith.negf %16 : vector<8x128xf32>
    %18 = math.exp %17 : vector<8x128xf32>
    %cst_9 = arith.constant 1.000000e+00 : f32
    %19 = vector.broadcast %cst_9 : f32 to vector<8x128xf32>
    %20 = arith.addf %19, %18 : vector<8x128xf32>
    %21 = arith.divf %19, %20 : vector<8x128xf32>
    %22 = vector.extract_strided_slice %11 {offsets = [0, 128], sizes = [8, 128], strides = [1, 1]} : vector<8x384xf32> to vector<8x128xf32>
    %23 = arith.addf %13, %22 : vector<8x128xf32>
    %24 = arith.negf %23 : vector<8x128xf32>
    %25 = math.exp %24 : vector<8x128xf32>
    %cst_10 = arith.constant 1.000000e+00 : f32
    %26 = vector.broadcast %cst_10 : f32 to vector<8x128xf32>
    %27 = arith.addf %26, %25 : vector<8x128xf32>
    %28 = arith.divf %26, %27 : vector<8x128xf32>
    %29 = vector.extract_strided_slice %11 {offsets = [0, 256], sizes = [8, 128], strides = [1, 1]} : vector<8x384xf32> to vector<8x128xf32>
    %30 = arith.addf %29, %5 : vector<8x128xf32>
    %31 = arith.mulf %21, %30 : vector<8x128xf32>
    %32 = arith.addf %14, %31 : vector<8x128xf32>
    %33 = math.tanh %32 : vector<8x128xf32>
    %cst_11 = arith.constant 1.000000e+00 : f32
    %34 = vector.broadcast %cst_11 : f32 to vector<8x128xf32>
    %35 = arith.subf %34, %28 : vector<8x128xf32>
    %36 = arith.mulf %35, %33 : vector<8x128xf32>
    %37 = arith.mulf %28, %7 : vector<8x128xf32>
    %38 = arith.addf %36, %37 : vector<8x128xf32>
    %c1_i32 = arith.constant 1 : i32
    %39 = arith.index_cast %c1_i32 : i32 to index
    %c0_12 = arith.constant 0 : index
    %c0_13 = arith.constant 0 : index
    %40 = vector.load %arg2[%39, %c0_12, %c0_13] : memref<8x8x384xf32, #tpu.memory_space<vmem>>, vector<1x8x384xf32>
    %41 = vector.shape_cast %40 : vector<1x8x384xf32> to vector<8x384xf32>
    %cst_14 = arith.constant dense<0.000000e+00> : vector<8x384xf32>
    %42 = tpu.matmul %38, %6, %cst_14 {dimension_numbers = #tpu.dot_dimension_numbers<[1], [0], [0], [1], [0, 0, 1, 1], [], []>} : vector<8x128xf32>, vector<128x384xf32>, vector<8x384xf32> -> vector<8x384xf32>
    %43 = vector.extract_strided_slice %41 {offsets = [0, 0], sizes = [8, 128], strides = [1, 1]} : vector<8x384xf32> to vector<8x128xf32>
    %44 = vector.extract_strided_slice %41 {offsets = [0, 128], sizes = [8, 128], strides = [1, 1]} : vector<8x384xf32> to vector<8x128xf32>
    %45 = vector.extract_strided_slice %41 {offsets = [0, 256], sizes = [8, 128], strides = [1, 1]} : vector<8x384xf32> to vector<8x128xf32>
    %46 = vector.extract_strided_slice %42 {offsets = [0, 0], sizes = [8, 128], strides = [1, 1]} : vector<8x384xf32> to vector<8x128xf32>
    %47 = arith.addf %43, %46 : vector<8x128xf32>
    %48 = arith.negf %47 : vector<8x128xf32>
    %49 = math.exp %48 : vector<8x128xf32>
    %cst_15 = arith.constant 1.000000e+00 : f32
    %50 = vector.broadcast %cst_15 : f32 to vector<8x128xf32>
    %51 = arith.addf %50, %49 : vector<8x128xf32>
    %52 = arith.divf %50, %51 : vector<8x128xf32>
    %53 = vector.extract_strided_slice %42 {offsets = [0, 128], sizes = [8, 128], strides = [1, 1]} : vector<8x384xf32> to vector<8x128xf32>
    %54 = arith.addf %44, %53 : vector<8x128xf32>
    %55 = arith.negf %54 : vector<8x128xf32>
    %56 = math.exp %55 : vector<8x128xf32>
    %cst_16 = arith.constant 1.000000e+00 : f32
    %57 = vector.broadcast %cst_16 : f32 to vector<8x128xf32>
    %58 = arith.addf %57, %56 : vector<8x128xf32>
    %59 = arith.divf %57, %58 : vector<8x128xf32>
    %60 = vector.extract_strided_slice %42 {offsets = [0, 256], sizes = [8, 128], strides = [1, 1]} : vector<8x384xf32> to vector<8x128xf32>
    %61 = arith.addf %60, %5 : vector<8x128xf32>
    %62 = arith.mulf %52, %61 : vector<8x128xf32>
    %63 = arith.addf %45, %62 : vector<8x128xf32>
    %64 = math.tanh %63 : vector<8x128xf32>
    %cst_17 = arith.constant 1.000000e+00 : f32
    %65 = vector.broadcast %cst_17 : f32 to vector<8x128xf32>
    %66 = arith.subf %65, %59 : vector<8x128xf32>
    %67 = arith.mulf %66, %64 : vector<8x128xf32>
    %68 = arith.mulf %59, %38 : vector<8x128xf32>
    %69 = arith.addf %67, %68 : vector<8x128xf32>
    %c2_i32 = arith.constant 2 : i32
    %70 = arith.index_cast %c2_i32 : i32 to index
    %c0_18 = arith.constant 0 : index
    %c0_19 = arith.constant 0 : index
    %71 = vector.load %arg2[%70, %c0_18, %c0_19] : memref<8x8x384xf32, #tpu.memory_space<vmem>>, vector<1x8x384xf32>
    %72 = vector.shape_cast %71 : vector<1x8x384xf32> to vector<8x384xf32>
    %cst_20 = arith.constant dense<0.000000e+00> : vector<8x384xf32>
    %73 = tpu.matmul %69, %6, %cst_20 {dimension_numbers = #tpu.dot_dimension_numbers<[1], [0], [0], [1], [0, 0, 1, 1], [], []>} : vector<8x128xf32>, vector<128x384xf32>, vector<8x384xf32> -> vector<8x384xf32>
    %74 = vector.extract_strided_slice %72 {offsets = [0, 0], sizes = [8, 128], strides = [1, 1]} : vector<8x384xf32> to vector<8x128xf32>
    %75 = vector.extract_strided_slice %72 {offsets = [0, 128], sizes = [8, 128], strides = [1, 1]} : vector<8x384xf32> to vector<8x128xf32>
    %76 = vector.extract_strided_slice %72 {offsets = [0, 256], sizes = [8, 128], strides = [1, 1]} : vector<8x384xf32> to vector<8x128xf32>
    %77 = vector.extract_strided_slice %73 {offsets = [0, 0], sizes = [8, 128], strides = [1, 1]} : vector<8x384xf32> to vector<8x128xf32>
    %78 = arith.addf %74, %77 : vector<8x128xf32>
    %79 = arith.negf %78 : vector<8x128xf32>
    %80 = math.exp %79 : vector<8x128xf32>
    %cst_21 = arith.constant 1.000000e+00 : f32
    %81 = vector.broadcast %cst_21 : f32 to vector<8x128xf32>
    %82 = arith.addf %81, %80 : vector<8x128xf32>
    %83 = arith.divf %81, %82 : vector<8x128xf32>
    %84 = vector.extract_strided_slice %73 {offsets = [0, 128], sizes = [8, 128], strides = [1, 1]} : vector<8x384xf32> to vector<8x128xf32>
    %85 = arith.addf %75, %84 : vector<8x128xf32>
    %86 = arith.negf %85 : vector<8x128xf32>
    %87 = math.exp %86 : vector<8x128xf32>
    %cst_22 = arith.constant 1.000000e+00 : f32
    %88 = vector.broadcast %cst_22 : f32 to vector<8x128xf32>
    %89 = arith.addf %88, %87 : vector<8x128xf32>
    %90 = arith.divf %88, %89 : vector<8x128xf32>
    %91 = vector.extract_strided_slice %73 {offsets = [0, 256], sizes = [8, 128], strides = [1, 1]} : vector<8x384xf32> to vector<8x128xf32>
    %92 = arith.addf %91, %5 : vector<8x128xf32>
    %93 = arith.mulf %83, %92 : vector<8x128xf32>
    %94 = arith.addf %76, %93 : vector<8x128xf32>
    %95 = math.tanh %94 : vector<8x128xf32>
    %cst_23 = arith.constant 1.000000e+00 : f32
    %96 = vector.broadcast %cst_23 : f32 to vector<8x128xf32>
    %97 = arith.subf %96, %90 : vector<8x128xf32>
    %98 = arith.mulf %97, %95 : vector<8x128xf32>
    %99 = arith.mulf %90, %69 : vector<8x128xf32>
    %100 = arith.addf %98, %99 : vector<8x128xf32>
    %c3_i32 = arith.constant 3 : i32
    %101 = arith.index_cast %c3_i32 : i32 to index
    %c0_24 = arith.constant 0 : index
    %c0_25 = arith.constant 0 : index
    %102 = vector.load %arg2[%101, %c0_24, %c0_25] : memref<8x8x384xf32, #tpu.memory_space<vmem>>, vector<1x8x384xf32>
    %103 = vector.shape_cast %102 : vector<1x8x384xf32> to vector<8x384xf32>
    %cst_26 = arith.constant dense<0.000000e+00> : vector<8x384xf32>
    %104 = tpu.matmul %100, %6, %cst_26 {dimension_numbers = #tpu.dot_dimension_numbers<[1], [0], [0], [1], [0, 0, 1, 1], [], []>} : vector<8x128xf32>, vector<128x384xf32>, vector<8x384xf32> -> vector<8x384xf32>
    %105 = vector.extract_strided_slice %103 {offsets = [0, 0], sizes = [8, 128], strides = [1, 1]} : vector<8x384xf32> to vector<8x128xf32>
    %106 = vector.extract_strided_slice %103 {offsets = [0, 128], sizes = [8, 128], strides = [1, 1]} : vector<8x384xf32> to vector<8x128xf32>
    %107 = vector.extract_strided_slice %103 {offsets = [0, 256], sizes = [8, 128], strides = [1, 1]} : vector<8x384xf32> to vector<8x128xf32>
    %108 = vector.extract_strided_slice %104 {offsets = [0, 0], sizes = [8, 128], strides = [1, 1]} : vector<8x384xf32> to vector<8x128xf32>
    %109 = arith.addf %105, %108 : vector<8x128xf32>
    %110 = arith.negf %109 : vector<8x128xf32>
    %111 = math.exp %110 : vector<8x128xf32>
    %cst_27 = arith.constant 1.000000e+00 : f32
    %112 = vector.broadcast %cst_27 : f32 to vector<8x128xf32>
    %113 = arith.addf %112, %111 : vector<8x128xf32>
    %114 = arith.divf %112, %113 : vector<8x128xf32>
    %115 = vector.extract_strided_slice %104 {offsets = [0, 128], sizes = [8, 128], strides = [1, 1]} : vector<8x384xf32> to vector<8x128xf32>
    %116 = arith.addf %106, %115 : vector<8x128xf32>
    %117 = arith.negf %116 : vector<8x128xf32>
    %118 = math.exp %117 : vector<8x128xf32>
    %cst_28 = arith.constant 1.000000e+00 : f32
    %119 = vector.broadcast %cst_28 : f32 to vector<8x128xf32>
    %120 = arith.addf %119, %118 : vector<8x128xf32>
    %121 = arith.divf %119, %120 : vector<8x128xf32>
    %122 = vector.extract_strided_slice %104 {offsets = [0, 256], sizes = [8, 128], strides = [1, 1]} : vector<8x384xf32> to vector<8x128xf32>
    %123 = arith.addf %122, %5 : vector<8x128xf32>
    %124 = arith.mulf %114, %123 : vector<8x128xf32>
    %125 = arith.addf %107, %124 : vector<8x128xf32>
    %126 = math.tanh %125 : vector<8x128xf32>
    %cst_29 = arith.constant 1.000000e+00 : f32
    %127 = vector.broadcast %cst_29 : f32 to vector<8x128xf32>
    %128 = arith.subf %127, %121 : vector<8x128xf32>
    %129 = arith.mulf %128, %126 : vector<8x128xf32>
    %130 = arith.mulf %121, %100 : vector<8x128xf32>
    %131 = arith.addf %129, %130 : vector<8x128xf32>
    %c4_i32 = arith.constant 4 : i32
    %132 = arith.index_cast %c4_i32 : i32 to index
    %c0_30 = arith.constant 0 : index
    %c0_31 = arith.constant 0 : index
    %133 = vector.load %arg2[%132, %c0_30, %c0_31] : memref<8x8x384xf32, #tpu.memory_space<vmem>>, vector<1x8x384xf32>
    %134 = vector.shape_cast %133 : vector<1x8x384xf32> to vector<8x384xf32>
    %cst_32 = arith.constant dense<0.000000e+00> : vector<8x384xf32>
    %135 = tpu.matmul %131, %6, %cst_32 {dimension_numbers = #tpu.dot_dimension_numbers<[1], [0], [0], [1], [0, 0, 1, 1], [], []>} : vector<8x128xf32>, vector<128x384xf32>, vector<8x384xf32> -> vector<8x384xf32>
    %136 = vector.extract_strided_slice %134 {offsets = [0, 0], sizes = [8, 128], strides = [1, 1]} : vector<8x384xf32> to vector<8x128xf32>
    %137 = vector.extract_strided_slice %134 {offsets = [0, 128], sizes = [8, 128], strides = [1, 1]} : vector<8x384xf32> to vector<8x128xf32>
    %138 = vector.extract_strided_slice %134 {offsets = [0, 256], sizes = [8, 128], strides = [1, 1]} : vector<8x384xf32> to vector<8x128xf32>
    %139 = vector.extract_strided_slice %135 {offsets = [0, 0], sizes = [8, 128], strides = [1, 1]} : vector<8x384xf32> to vector<8x128xf32>
    %140 = arith.addf %136, %139 : vector<8x128xf32>
    %141 = arith.negf %140 : vector<8x128xf32>
    %142 = math.exp %141 : vector<8x128xf32>
    %cst_33 = arith.constant 1.000000e+00 : f32
    %143 = vector.broadcast %cst_33 : f32 to vector<8x128xf32>
    %144 = arith.addf %143, %142 : vector<8x128xf32>
    %145 = arith.divf %143, %144 : vector<8x128xf32>
    %146 = vector.extract_strided_slice %135 {offsets = [0, 128], sizes = [8, 128], strides = [1, 1]} : vector<8x384xf32> to vector<8x128xf32>
    %147 = arith.addf %137, %146 : vector<8x128xf32>
    %148 = arith.negf %147 : vector<8x128xf32>
    %149 = math.exp %148 : vector<8x128xf32>
    %cst_34 = arith.constant 1.000000e+00 : f32
    %150 = vector.broadcast %cst_34 : f32 to vector<8x128xf32>
    %151 = arith.addf %150, %149 : vector<8x128xf32>
    %152 = arith.divf %150, %151 : vector<8x128xf32>
    %153 = vector.extract_strided_slice %135 {offsets = [0, 256], sizes = [8, 128], strides = [1, 1]} : vector<8x384xf32> to vector<8x128xf32>
    %154 = arith.addf %153, %5 : vector<8x128xf32>
    %155 = arith.mulf %145, %154 : vector<8x128xf32>
    %156 = arith.addf %138, %155 : vector<8x128xf32>
    %157 = math.tanh %156 : vector<8x128xf32>
    %cst_35 = arith.constant 1.000000e+00 : f32
    %158 = vector.broadcast %cst_35 : f32 to vector<8x128xf32>
    %159 = arith.subf %158, %152 : vector<8x128xf32>
    %160 = arith.mulf %159, %157 : vector<8x128xf32>
    %161 = arith.mulf %152, %131 : vector<8x128xf32>
    %162 = arith.addf %160, %161 : vector<8x128xf32>
    %c5_i32 = arith.constant 5 : i32
    %163 = arith.index_cast %c5_i32 : i32 to index
    %c0_36 = arith.constant 0 : index
    %c0_37 = arith.constant 0 : index
    %164 = vector.load %arg2[%163, %c0_36, %c0_37] : memref<8x8x384xf32, #tpu.memory_space<vmem>>, vector<1x8x384xf32>
    %165 = vector.shape_cast %164 : vector<1x8x384xf32> to vector<8x384xf32>
    %cst_38 = arith.constant dense<0.000000e+00> : vector<8x384xf32>
    %166 = tpu.matmul %162, %6, %cst_38 {dimension_numbers = #tpu.dot_dimension_numbers<[1], [0], [0], [1], [0, 0, 1, 1], [], []>} : vector<8x128xf32>, vector<128x384xf32>, vector<8x384xf32> -> vector<8x384xf32>
    %167 = vector.extract_strided_slice %165 {offsets = [0, 0], sizes = [8, 128], strides = [1, 1]} : vector<8x384xf32> to vector<8x128xf32>
    %168 = vector.extract_strided_slice %165 {offsets = [0, 128], sizes = [8, 128], strides = [1, 1]} : vector<8x384xf32> to vector<8x128xf32>
    %169 = vector.extract_strided_slice %165 {offsets = [0, 256], sizes = [8, 128], strides = [1, 1]} : vector<8x384xf32> to vector<8x128xf32>
    %170 = vector.extract_strided_slice %166 {offsets = [0, 0], sizes = [8, 128], strides = [1, 1]} : vector<8x384xf32> to vector<8x128xf32>
    %171 = arith.addf %167, %170 : vector<8x128xf32>
    %172 = arith.negf %171 : vector<8x128xf32>
    %173 = math.exp %172 : vector<8x128xf32>
    %cst_39 = arith.constant 1.000000e+00 : f32
    %174 = vector.broadcast %cst_39 : f32 to vector<8x128xf32>
    %175 = arith.addf %174, %173 : vector<8x128xf32>
    %176 = arith.divf %174, %175 : vector<8x128xf32>
    %177 = vector.extract_strided_slice %166 {offsets = [0, 128], sizes = [8, 128], strides = [1, 1]} : vector<8x384xf32> to vector<8x128xf32>
    %178 = arith.addf %168, %177 : vector<8x128xf32>
    %179 = arith.negf %178 : vector<8x128xf32>
    %180 = math.exp %179 : vector<8x128xf32>
    %cst_40 = arith.constant 1.000000e+00 : f32
    %181 = vector.broadcast %cst_40 : f32 to vector<8x128xf32>
    %182 = arith.addf %181, %180 : vector<8x128xf32>
    %183 = arith.divf %181, %182 : vector<8x128xf32>
    %184 = vector.extract_strided_slice %166 {offsets = [0, 256], sizes = [8, 128], strides = [1, 1]} : vector<8x384xf32> to vector<8x128xf32>
    %185 = arith.addf %184, %5 : vector<8x128xf32>
    %186 = arith.mulf %176, %185 : vector<8x128xf32>
    %187 = arith.addf %169, %186 : vector<8x128xf32>
    %188 = math.tanh %187 : vector<8x128xf32>
    %cst_41 = arith.constant 1.000000e+00 : f32
    %189 = vector.broadcast %cst_41 : f32 to vector<8x128xf32>
    %190 = arith.subf %189, %183 : vector<8x128xf32>
    %191 = arith.mulf %190, %188 : vector<8x128xf32>
    %192 = arith.mulf %183, %162 : vector<8x128xf32>
    %193 = arith.addf %191, %192 : vector<8x128xf32>
    %c6_i32 = arith.constant 6 : i32
    %194 = arith.index_cast %c6_i32 : i32 to index
    %c0_42 = arith.constant 0 : index
    %c0_43 = arith.constant 0 : index
    %195 = vector.load %arg2[%194, %c0_42, %c0_43] : memref<8x8x384xf32, #tpu.memory_space<vmem>>, vector<1x8x384xf32>
    %196 = vector.shape_cast %195 : vector<1x8x384xf32> to vector<8x384xf32>
    %cst_44 = arith.constant dense<0.000000e+00> : vector<8x384xf32>
    %197 = tpu.matmul %193, %6, %cst_44 {dimension_numbers = #tpu.dot_dimension_numbers<[1], [0], [0], [1], [0, 0, 1, 1], [], []>} : vector<8x128xf32>, vector<128x384xf32>, vector<8x384xf32> -> vector<8x384xf32>
    %198 = vector.extract_strided_slice %196 {offsets = [0, 0], sizes = [8, 128], strides = [1, 1]} : vector<8x384xf32> to vector<8x128xf32>
    %199 = vector.extract_strided_slice %196 {offsets = [0, 128], sizes = [8, 128], strides = [1, 1]} : vector<8x384xf32> to vector<8x128xf32>
    %200 = vector.extract_strided_slice %196 {offsets = [0, 256], sizes = [8, 128], strides = [1, 1]} : vector<8x384xf32> to vector<8x128xf32>
    %201 = vector.extract_strided_slice %197 {offsets = [0, 0], sizes = [8, 128], strides = [1, 1]} : vector<8x384xf32> to vector<8x128xf32>
    %202 = arith.addf %198, %201 : vector<8x128xf32>
    %203 = arith.negf %202 : vector<8x128xf32>
    %204 = math.exp %203 : vector<8x128xf32>
    %cst_45 = arith.constant 1.000000e+00 : f32
    %205 = vector.broadcast %cst_45 : f32 to vector<8x128xf32>
    %206 = arith.addf %205, %204 : vector<8x128xf32>
    %207 = arith.divf %205, %206 : vector<8x128xf32>
    %208 = vector.extract_strided_slice %197 {offsets = [0, 128], sizes = [8, 128], strides = [1, 1]} : vector<8x384xf32> to vector<8x128xf32>
    %209 = arith.addf %199, %208 : vector<8x128xf32>
    %210 = arith.negf %209 : vector<8x128xf32>
    %211 = math.exp %210 : vector<8x128xf32>
    %cst_46 = arith.constant 1.000000e+00 : f32
    %212 = vector.broadcast %cst_46 : f32 to vector<8x128xf32>
    %213 = arith.addf %212, %211 : vector<8x128xf32>
    %214 = arith.divf %212, %213 : vector<8x128xf32>
    %215 = vector.extract_strided_slice %197 {offsets = [0, 256], sizes = [8, 128], strides = [1, 1]} : vector<8x384xf32> to vector<8x128xf32>
    %216 = arith.addf %215, %5 : vector<8x128xf32>
    %217 = arith.mulf %207, %216 : vector<8x128xf32>
    %218 = arith.addf %200, %217 : vector<8x128xf32>
    %219 = math.tanh %218 : vector<8x128xf32>
    %cst_47 = arith.constant 1.000000e+00 : f32
    %220 = vector.broadcast %cst_47 : f32 to vector<8x128xf32>
    %221 = arith.subf %220, %214 : vector<8x128xf32>
    %222 = arith.mulf %221, %219 : vector<8x128xf32>
    %223 = arith.mulf %214, %193 : vector<8x128xf32>
    %224 = arith.addf %222, %223 : vector<8x128xf32>
    %c7_i32 = arith.constant 7 : i32
    %225 = arith.index_cast %c7_i32 : i32 to index
    %c0_48 = arith.constant 0 : index
    %c0_49 = arith.constant 0 : index
    %226 = vector.load %arg2[%225, %c0_48, %c0_49] : memref<8x8x384xf32, #tpu.memory_space<vmem>>, vector<1x8x384xf32>
    %227 = vector.shape_cast %226 : vector<1x8x384xf32> to vector<8x384xf32>
    %cst_50 = arith.constant dense<0.000000e+00> : vector<8x384xf32>
    %228 = tpu.matmul %224, %6, %cst_50 {dimension_numbers = #tpu.dot_dimension_numbers<[1], [0], [0], [1], [0, 0, 1, 1], [], []>} : vector<8x128xf32>, vector<128x384xf32>, vector<8x384xf32> -> vector<8x384xf32>
    %229 = vector.extract_strided_slice %227 {offsets = [0, 0], sizes = [8, 128], strides = [1, 1]} : vector<8x384xf32> to vector<8x128xf32>
    %230 = vector.extract_strided_slice %227 {offsets = [0, 128], sizes = [8, 128], strides = [1, 1]} : vector<8x384xf32> to vector<8x128xf32>
    %231 = vector.extract_strided_slice %227 {offsets = [0, 256], sizes = [8, 128], strides = [1, 1]} : vector<8x384xf32> to vector<8x128xf32>
    %232 = vector.extract_strided_slice %228 {offsets = [0, 0], sizes = [8, 128], strides = [1, 1]} : vector<8x384xf32> to vector<8x128xf32>
    %233 = arith.addf %229, %232 : vector<8x128xf32>
    %234 = arith.negf %233 : vector<8x128xf32>
    %235 = math.exp %234 : vector<8x128xf32>
    %cst_51 = arith.constant 1.000000e+00 : f32
    %236 = vector.broadcast %cst_51 : f32 to vector<8x128xf32>
    %237 = arith.addf %236, %235 : vector<8x128xf32>
    %238 = arith.divf %236, %237 : vector<8x128xf32>
    %239 = vector.extract_strided_slice %228 {offsets = [0, 128], sizes = [8, 128], strides = [1, 1]} : vector<8x384xf32> to vector<8x128xf32>
    %240 = arith.addf %230, %239 : vector<8x128xf32>
    %241 = arith.negf %240 : vector<8x128xf32>
    %242 = math.exp %241 : vector<8x128xf32>
    %cst_52 = arith.constant 1.000000e+00 : f32
    %243 = vector.broadcast %cst_52 : f32 to vector<8x128xf32>
    %244 = arith.addf %243, %242 : vector<8x128xf32>
    %245 = arith.divf %243, %244 : vector<8x128xf32>
    %246 = vector.extract_strided_slice %228 {offsets = [0, 256], sizes = [8, 128], strides = [1, 1]} : vector<8x384xf32> to vector<8x128xf32>
    %247 = arith.addf %246, %5 : vector<8x128xf32>
    %248 = arith.mulf %238, %247 : vector<8x128xf32>
    %249 = arith.addf %231, %248 : vector<8x128xf32>
    %250 = math.tanh %249 : vector<8x128xf32>
    %cst_53 = arith.constant 1.000000e+00 : f32
    %251 = vector.broadcast %cst_53 : f32 to vector<8x128xf32>
    %252 = arith.subf %251, %245 : vector<8x128xf32>
    %253 = arith.mulf %252, %250 : vector<8x128xf32>
    %254 = arith.mulf %245, %224 : vector<8x128xf32>
    %255 = arith.addf %253, %254 : vector<8x128xf32>
    %c8_i32 = arith.constant 8 : i32
    %c0_54 = arith.constant 0 : index
    %c0_55 = arith.constant 0 : index
    %256 = vector.load %arg6[%c0_54, %c0_55] : memref<8x128xf32, #tpu.memory_space<vmem>>, vector<8x128xf32>
    tpu.vector_store %arg6[%c0_54, %c0_55], %255 {strides = array<i32>} : memref<8x128xf32, #tpu.memory_space<vmem>>, vector<8x128xf32>,
    %c0_56 = arith.constant 0 : index
    %c0_57 = arith.constant 0 : index
    %257 = vector.load %arg5[%c0_56, %c0_57] : memref<8x128xf32, #tpu.memory_space<vmem>>, vector<8x128xf32>
    tpu.vector_store %arg5[%c0_56, %c0_57], %255 {strides = array<i32>} : memref<8x128xf32, #tpu.memory_space<vmem>>, vector<8x128xf32>,
    return
  }
  func.func @transform_0(%arg0: i32, %arg1: i32) -> (i32, i32, i32) {
    %c0_i32 = arith.constant 0 : i32
    %c0_i32_0 = arith.constant 0 : i32
    return %arg1, %arg0, %c0_i32 : i32, i32, i32
  }
  func.func @transform_1(%arg0: i32, %arg1: i32) -> (i32, i32) {
    %c0_i32 = arith.constant 0 : i32
    %c0_i32_0 = arith.constant 0 : i32
    %c0_i32_1 = arith.constant 0 : i32
    return %c0_i32, %c0_i32_0 : i32, i32
  }
  func.func @transform_2(%arg0: i32, %arg1: i32) -> (i32, i32) {
    %c0_i32 = arith.constant 0 : i32
    %c0_i32_0 = arith.constant 0 : i32
    %c0_i32_1 = arith.constant 0 : i32
    return %c0_i32, %c0_i32_0 : i32, i32
  }
  func.func @transform_3(%arg0: i32, %arg1: i32) -> (i32, i32) {
    %c0_i32 = arith.constant 0 : i32
    %c0_i32_0 = arith.constant 0 : i32
    return %arg0, %c0_i32 : i32, i32
  }
}

</mosaic_0001>

<llo_original>
// kernel: tpu_custom_call.1
$region0: #{tpu_custom_call.1}
  #allocation0 [shape = 'u32[]', space=smem, size = 0x4, offset = 0x4, fixed_abs, tag = 'smem constant byte address 0x4 - core index']
  #allocation1 [shape = 'u32[144,128]{1,0:T(1,128)}', space=vmem, size = 0x12000, scoped, tag = 'internal scratch']
  #allocation2 [shape = 'f32[8,128]{1,0:T(8,128)}', space=vmem, size = 0x1000, scoped, tag = 'scratch operand']
  %s0 = inlined_call_operand.hbm [shape: f32[8,8,384], index: 0, kind: input, shape index: {}]
  %s1 = inlined_call_operand.hbm [shape: f32[128,384], index: 1, kind: input, shape index: {}]
  %s2 = inlined_call_operand.vmem [shape: f32[1,128], index: 2, kind: input, shape index: {}]
  %s3 = inlined_call_operand.hbm [shape: f32[8,128], index: 3, kind: output, shape index: {}]
  %s4 = sld [smem:[#allocation0]]
  $region34: #{tpu_custom_call.1} parent=0
    _
  %s6 = ssub.s32 1, %s4
  %s7 = scalar_select 0, %s6, %s4
  $region1: #{tpu_custom_call.1} parent=0
    #allocation3 [shape = 'u8[98304]{0}', space=vmem, size = 0x18000, scoped, tag = 'input window, operand 0, single buffered']
    #allocation4 [shape = 's32[1]{0}', space=sflag, size = 0x4, scoped, tag = 'scoped memory for tpu_custom_call.1']
    #allocation5 [shape = 's32[1]{0}', space=sflag, size = 0x4, scoped, tag = 'scoped memory for tpu_custom_call.1']
    #allocation6 [shape = 'u8[196608]{0}', space=vmem, size = 0x30000, scoped, tag = 'input window, operand 1, single buffered']
    #allocation7 [shape = 's32[1]{0}', space=sflag, size = 0x4, scoped, tag = 'scoped memory for tpu_custom_call.1']
    #allocation8 [shape = 'u8[4096]{0}', space=vmem, size = 0x1000, scoped, tag = 'output window, operand 0, single buffered']
    %8 = vsyncpa [#allocation4], 0
    %9 = vsyncpa [#allocation7], 0
    %10 = vsyncpa [#allocation5], 0
    // Predicated region
    $region2: #{tpu_custom_call.1} parent=1 // pred_check
      _
    $region3: #{tpu_custom_call.1} parent=1 // pred_check_branch
      %12 = sbr.rel (0) target = $region5
    $region4: #{tpu_custom_call.1} parent=1 // pred_region
      %s14 = ssub.s32 3072, 3072
      %15 = vsyncadd [#allocation4], %s14
      %s16 = sshll.u32 [#allocation3], 4
      %s17 = int_to_ptr.vmem [resolvable:$true] %s16
      %22 = dma.hbm_to_vmem [thread:$0]  %s0, 3072, %s17, [#allocation4], 384, 384, 24
    $region5: #{tpu_custom_call.1} parent=1 // pred_fallthru
      _
    // Predicated region
    $region6: #{tpu_custom_call.1} parent=1 // pred_check
      _
    $region7: #{tpu_custom_call.1} parent=1 // pred_check_branch
      %24 = sbr.rel (0) target = $region9
    $region8: #{tpu_custom_call.1} parent=1 // pred_region
      %s26 = ssub.s32 6144, 6144
      %27 = vsyncadd [#allocation7], %s26
      %s28 = sshll.u32 [#allocation6], 4
      %s29 = int_to_ptr.vmem [resolvable:$true] %s28
      %34 = dma.hbm_to_vmem [thread:$0]  %s1, 6144, %s29, [#allocation7], 384, 384, 24
    $region9: #{tpu_custom_call.1} parent=1 // pred_fallthru
      _
    // Predicated region
    $region10: #{tpu_custom_call.1} parent=1 // pred_check
      _
    $region11: #{tpu_custom_call.1} parent=1 // pred_check_branch
      %36 = sbr.rel (0) target = $region13
    $region12: #{tpu_custom_call.1} parent=1 // pred_region
      _
    $region13: #{tpu_custom_call.1} parent=1 // pred_fallthru
      _
    // Predicated region
    $region14: #{tpu_custom_call.1} parent=1 // pred_check
      _
    $region15: #{tpu_custom_call.1} parent=1 // pred_check_branch
      %38 = sbr.rel (0) target = $region17
    $region16: #{tpu_custom_call.1} parent=1 // pred_region
      %39 = dma.done [#allocation4], 3072
    $region17: #{tpu_custom_call.1} parent=1 // pred_fallthru
      _
    // Predicated region
    $region18: #{tpu_custom_call.1} parent=1 // pred_check
      _
    $region19: #{tpu_custom_call.1} parent=1 // pred_check_branch
      %41 = sbr.rel (0) target = $region21
    $region20: #{tpu_custom_call.1} parent=1 // pred_region
      %42 = dma.done [#allocation7], 6144
    $region21: #{tpu_custom_call.1} parent=1 // pred_fallthru
      _
    %p43 = scmp.eq.s32.totalorder 0, 0
    // Predicated region
    $region22: #{tpu_custom_call.1} parent=1 // pred_check
      %p44 = pneg %p43
    $region23: #{tpu_custom_call.1} parent=1 // pred_check_branch
      %46 = sbr.rel (%p44) target = $region25
    $region24: #{tpu_custom_call.1} parent=1 // pred_region
      %47 = vst [vmem:[#allocation2] sm:$0xff] 0.0
    $region25: #{tpu_custom_call.1} parent=1 // pred_fallthru
      _
    %v48 = vld [vmem:[%s2] sm:$0x1]
    %v50 = vlaneseq
    %v51 = vshrl.u32 %v50, 7
    %v52 = vsub.s32 0, %v51
    %v53 = vrot.slane %v48, %v52
    %v55 = vld [vmem:[#allocation6] sm:$0xff]
    %v56 = vld [vmem:[#allocation6 + $0x8] sm:$0xff]
    %v57 = vld [vmem:[#allocation6 + $0x10] sm:$0xff]
    %v58 = vld [vmem:[#allocation6 + $0x18] sm:$0xff]
    %v59 = vld [vmem:[#allocation6 + $0x20] sm:$0xff]
    %v60 = vld [vmem:[#allocation6 + $0x28] sm:$0xff]
    %v61 = vld [vmem:[#allocation6 + $0x30] sm:$0xff]
    %v62 = vld [vmem:[#allocation6 + $0x38] sm:$0xff]
    %v63 = vld [vmem:[#allocation6 + $0x40] sm:$0xff]
    %v64 = vld [vmem:[#allocation6 + $0x48] sm:$0xff]
    %v65 = vld [vmem:[#allocation6 + $0x50] sm:$0xff]
    %v66 = vld [vmem:[#allocation6 + $0x58] sm:$0xff]
    %v67 = vld [vmem:[#allocation6 + $0x60] sm:$0xff]
    %v68 = vld [vmem:[#allocation6 + $0x68] sm:$0xff]
    %v69 = vld [vmem:[#allocation6 + $0x70] sm:$0xff]
    %v70 = vld [vmem:[#allocation6 + $0x78] sm:$0xff]
    %v71 = vld [vmem:[#allocation6 + $0x80] sm:$0xff]
    %v72 = vld [vmem:[#allocation6 + $0x88] sm:$0xff]
    %v73 = vld [vmem:[#allocation6 + $0x90] sm:$0xff]
    %v74 = vld [vmem:[#allocation6 + $0x98] sm:$0xff]
    %v75 = vld [vmem:[#allocation6 + $0xa0] sm:$0xff]
    %v76 = vld [vmem:[#allocation6 + $0xa8] sm:$0xff]
    %v77 = vld [vmem:[#allocation6 + $0xb0] sm:$0xff]
    %v78 = vld [vmem:[#allocation6 + $0xb8] sm:$0xff]
    %v79 = vld [vmem:[#allocation6 + $0xc0] sm:$0xff]
    %v80 = vld [vmem:[#allocation6 + $0xc8] sm:$0xff]
    %v81 = vld [vmem:[#allocation6 + $0xd0] sm:$0xff]
    %v82 = vld [vmem:[#allocation6 + $0xd8] sm:$0xff]
    %v83 = vld [vmem:[#allocation6 + $0xe0] sm:$0xff]
    %v84 = vld [vmem:[#allocation6 + $0xe8] sm:$0xff]
    %v85 = vld [vmem:[#allocation6 + $0xf0] sm:$0xff]
    %v86 = vld [vmem:[#allocation6 + $0xf8] sm:$0xff]
    %v87 = vld [vmem:[#allocation6 + $0x100] sm:$0xff]
    %v88 = vld [vmem:[#allocation6 + $0x108] sm:$0xff]
    %v89 = vld [vmem:[#allocation6 + $0x110] sm:$0xff]
    %v90 = vld [vmem:[#allocation6 + $0x118] sm:$0xff]
    %v91 = vld [vmem:[#allocation6 + $0x120] sm:$0xff]
    %v92 = vld [vmem:[#allocation6 + $0x128] sm:$0xff]
    %v93 = vld [vmem:[#allocation6 + $0x130] sm:$0xff]
    %v94 = vld [vmem:[#allocation6 + $0x138] sm:$0xff]
    %v95 = vld [vmem:[#allocation6 + $0x140] sm:$0xff]
    %v96 = vld [vmem:[#allocation6 + $0x148] sm:$0xff]
    %v97 = vld [vmem:[#allocation6 + $0x150] sm:$0xff]
    %v98 = vld [vmem:[#allocation6 + $0x158] sm:$0xff]
    %v99 = vld [vmem:[#allocation6 + $0x160] sm:$0xff]
    %v100 = vld [vmem:[#allocation6 + $0x168] sm:$0xff]
    %v101 = vld [vmem:[#allocation6 + $0x170] sm:$0xff]
    %v102 = vld [vmem:[#allocation6 + $0x178] sm:$0xff]
    %v103 = vld [vmem:[#allocation2] sm:$0xff]
    %v104 = vld [vmem:[#allocation3] sm:$0xff]
    %v105 = vld [vmem:[#allocation3 + $0x8] sm:$0xff]
    %v106 = vld [vmem:[#allocation3 + $0x10] sm:$0xff]
    %107 = vmatprep.subr.mxu0 %v56
    %108 = vmatpush1.msra.mxu0 %v55
    %109 = vmatprep.subr.mxu0 %v59
    %110 = vmatpush1.msra.mxu0 %v58
    %111 = vmatprep.subr.mxu0 %v62
    %112 = vmatpush1.msra.mxu0 %v61
    %113 = vmatprep.subr.mxu0 %v65
    %114 = vmatpush1.msra.mxu0 %v64
    %115 = vmatprep.subr.mxu0 %v68
    %116 = vmatpush1.msra.mxu0 %v67
    %117 = vmatprep.subr.mxu0 %v71
    %118 = vmatpush1.msra.mxu0 %v70
    %119 = vmatprep.subr.mxu0 %v74
    %120 = vmatpush1.msra.mxu0 %v73
    %121 = vmatprep.subr.mxu0 %v77
    %122 = vmatpush1.msra.mxu0 %v76
    %123 = vmatprep.subr.mxu0 %v80
    %124 = vmatpush1.msra.mxu0 %v79
    %125 = vmatprep.subr.mxu0 %v83
    %126 = vmatpush1.msra.mxu0 %v82
    %127 = vmatprep.subr.mxu0 %v86
    %128 = vmatpush1.msra.mxu0 %v85
    %129 = vmatprep.subr.mxu0 %v89
    %130 = vmatpush1.msra.mxu0 %v88
    %131 = vmatprep.subr.mxu0 %v92
    %132 = vmatpush1.msra.mxu0 %v91
    %133 = vmatprep.subr.mxu0 %v95
    %134 = vmatpush1.msra.mxu0 %v94
    %135 = vmatprep.subr.mxu0 %v98
    %136 = vmatpush1.msra.mxu0 %v97
    %137 = vmatprep.subr.mxu0 %v101
    %138 = vmatpush1.msra.mxu0 %v100
    %139 = vmatprep.subr.mxu0 0.0
    %140 = vmatpush1.msra.mxu0 0.0
    %141 = vmatprep.subr.mxu0 0.0
    %142 = vmatpush1.msra.mxu0 0.0
    %143 = vmatprep.subr.mxu0 0.0
    %144 = vmatpush1.msra.mxu0 0.0
    %145 = vmatprep.subr.mxu0 0.0
    %146 = vmatpush1.msra.mxu0 0.0
    %147 = vmatprep.subr.mxu0 0.0
    %148 = vmatpush1.msra.mxu0 0.0
    %149 = vmatprep.subr.mxu0 0.0
    %150 = vmatpush1.msra.mxu0 0.0
    %151 = vmatprep.subr.mxu0 0.0
    %152 = vmatpush1.msra.mxu0 0.0
    %153 = vmatprep.subr.mxu0 0.0
    %154 = vmatpush1.msra.mxu0 0.0
    %155 = vmatprep.subr.mxu0 0.0
    %156 = vmatpush1.msra.mxu0 0.0
    %157 = vmatprep.subr.mxu0 0.0
    %158 = vmatpush1.msra.mxu0 0.0
    %159 = vmatprep.subr.mxu0 0.0
    %160 = vmatpush1.msra.mxu0 0.0
    %161 = vmatprep.subr.mxu0 0.0
    %162 = vmatpush1.msra.mxu0 0.0
    %163 = vmatprep.subr.mxu0 0.0
    %164 = vmatpush1.msra.mxu0 0.0
    %165 = vmatprep.subr.mxu0 0.0
    %166 = vmatpush1.msra.mxu0 0.0
    %167 = vmatprep.subr.mxu0 0.0
    %168 = vmatpush1.msra.mxu0 0.0
    %169 = vmatprep.subr.mxu0 0.0
    %170 = vmatpush1.msra.mxu0 0.0
    %171 = vmatprep.mubr.f32.mxu0 0.0
    %172 = vmatmul.mubr.f32.gmra.mrb[0].mxu0 %v103
    %v173 = vpop.f32.mrb[0].mxu0
    %v174 = vadd.f32 0.0, %v173
    %v175 = vpop.f32.mrb[0].mxu0
    %v176 = vadd.f32 0.0, %v175
    %177 = vdwg.mxu0
    %178 = vmatprep.subr.mxu0 0.0
    %179 = vmatpush1.msra.mxu0 %v57
    %180 = vmatprep.subr.mxu0 0.0
    %181 = vmatpush1.msra.mxu0 %v60
    %182 = vmatprep.subr.mxu0 0.0
    %183 = vmatpush1.msra.mxu0 %v63
    %184 = vmatprep.subr.mxu0 0.0
    %185 = vmatpush1.msra.mxu0 %v66
    %186 = vmatprep.subr.mxu0 0.0
    %187 = vmatpush1.msra.mxu0 %v69
    %188 = vmatprep.subr.mxu0 0.0
    %189 = vmatpush1.msra.mxu0 %v72
    %190 = vmatprep.subr.mxu0 0.0
    %191 = vmatpush1.msra.mxu0 %v75
    %192 = vmatprep.subr.mxu0 0.0
    %193 = vmatpush1.msra.mxu0 %v78
    %194 = vmatprep.subr.mxu0 0.0
    %195 = vmatpush1.msra.mxu0 %v81
    %196 = vmatprep.subr.mxu0 0.0
    %197 = vmatpush1.msra.mxu0 %v84
    %198 = vmatprep.subr.mxu0 0.0
    %199 = vmatpush1.msra.mxu0 %v87
    %200 = vmatprep.subr.mxu0 0.0
    %201 = vmatpush1.msra.mxu0 %v90
    %202 = vmatprep.subr.mxu0 0.0
    %203 = vmatpush1.msra.mxu0 %v93
    %204 = vmatprep.subr.mxu0 0.0
    %205 = vmatpush1.msra.mxu0 %v96
    %206 = vmatprep.subr.mxu0 0.0
    %207 = vmatpush1.msra.mxu0 %v99
    %208 = vmatprep.subr.mxu0 0.0
    %209 = vmatpush1.msra.mxu0 %v102
    %210 = vmatprep.subr.mxu0 0.0
    %211 = vmatpush1.msra.mxu0 0.0
    %212 = vmatprep.subr.mxu0 0.0
    %213 = vmatpush1.msra.mxu0 0.0
    %214 = vmatprep.subr.mxu0 0.0
    %215 = vmatpush1.msra.mxu0 0.0
    %216 = vmatprep.subr.mxu0 0.0
    %217 = vmatpush1.msra.mxu0 0.0
    %218 = vmatprep.subr.mxu0 0.0
    %219 = vmatpush1.msra.mxu0 0.0
    %220 = vmatprep.subr.mxu0 0.0
    %221 = vmatpush1.msra.mxu0 0.0
    %222 = vmatprep.subr.mxu0 0.0
    %223 = vmatpush1.msra.mxu0 0.0
    %224 = vmatprep.subr.mxu0 0.0
    %225 = vmatpush1.msra.mxu0 0.0
    %226 = vmatprep.subr.mxu0 0.0
    %227 = vmatpush1.msra.mxu0 0.0
    %228 = vmatprep.subr.mxu0 0.0
    %229 = vmatpush1.msra.mxu0 0.0
    %230 = vmatprep.subr.mxu0 0.0
    %231 = vmatpush1.msra.mxu0 0.0
    %232 = vmatprep.subr.mxu0 0.0
    %233 = vmatpush1.msra.mxu0 0.0
    %234 = vmatprep.subr.mxu0 0.0
    %235 = vmatpush1.msra.mxu0 0.0
    %236 = vmatprep.subr.mxu0 0.0
    %237 = vmatpush1.msra.mxu0 0.0
    %238 = vmatprep.subr.mxu0 0.0
    %239 = vmatpush1.msra.mxu0 0.0
    %240 = vmatprep.subr.mxu0 0.0
    %241 = vmatpush1.msra.mxu0 0.0
    %242 = vmatprep.mubr.f32.mxu0 0.0
    %243 = vmatmul.mubr.f32.gmra.mrb[0].mxu0 %v103
    %v244 = vpop.f32.mrb[0].mxu0
    %v245 = vadd.f32 0.0, %v244
    %v246 = vpop.f32.mrb[0].mxu0
    %247 = vdwg.mxu0
    %v248 = vadd.f32 %v104, %v174
    %v249 = vxor.u32 %v248, 2147483648
    %v250 = vmul.f32 %v249, 1.442695
    %v251 = vpow.pop %v250
    %v252 = vadd.f32 %v251, 1.0
    %v253 = vrcp.pop %v252
    %v254 = vmul.f32 1.0, %v253
    %v255 = vadd.f32 %v105, %v176
    %v256 = vxor.u32 %v255, 2147483648
    %v257 = vmul.f32 %v256, 1.442695
    %v258 = vpow.pop %v257
    %v259 = vadd.f32 %v258, 1.0
    %v260 = vrcp.pop %v259
    %v261 = vmul.f32 1.0, %v260
    %v262 = vadd.f32 %v245, %v53
    %v263 = vmul.f32 %v254, %v262
    %v264 = vadd.f32 %v106, %v263
    %v265 = vtanh.pop %v264
    %v266 = vsub.f32 1.0, %v261
    %v267 = vmul.f32 %v266, %v265
    %v268 = vmul.f32 %v261, %v103
    %v269 = vadd.f32 %v267, %v268
    %s270 = scalar_lea.vmem [#allocation3], 24
    %v271 = vld [vmem:[%s270] sm:$0xff]
    %v272 = vld [vmem:[%s270 + $0x8] sm:$0xff]
    %v273 = vld [vmem:[%s270 + $0x10] sm:$0xff]
    %274 = vmatprep.subr.mxu0 %v56
    %275 = vmatpush1.msra.mxu0 %v55
    %276 = vmatprep.subr.mxu0 %v59
    %277 = vmatpush1.msra.mxu0 %v58
    %278 = vmatprep.subr.mxu0 %v62
    %279 = vmatpush1.msra.mxu0 %v61
    %280 = vmatprep.subr.mxu0 %v65
    %281 = vmatpush1.msra.mxu0 %v64
    %282 = vmatprep.subr.mxu0 %v68
    %283 = vmatpush1.msra.mxu0 %v67
    %284 = vmatprep.subr.mxu0 %v71
    %285 = vmatpush1.msra.mxu0 %v70
    %286 = vmatprep.subr.mxu0 %v74
    %287 = vmatpush1.msra.mxu0 %v73
    %288 = vmatprep.subr.mxu0 %v77
    %289 = vmatpush1.msra.mxu0 %v76
    %290 = vmatprep.subr.mxu0 %v80
    %291 = vmatpush1.msra.mxu0 %v79
    %292 = vmatprep.subr.mxu0 %v83
    %293 = vmatpush1.msra.mxu0 %v82
    %294 = vmatprep.subr.mxu0 %v86
    %295 = vmatpush1.msra.mxu0 %v85
    %296 = vmatprep.subr.mxu0 %v89
    %297 = vmatpush1.msra.mxu0 %v88
    %298 = vmatprep.subr.mxu0 %v92
    %299 = vmatpush1.msra.mxu0 %v91
    %300 = vmatprep.subr.mxu0 %v95
    %301 = vmatpush1.msra.mxu0 %v94
    %302 = vmatprep.subr.mxu0 %v98
    %303 = vmatpush1.msra.mxu0 %v97
    %304 = vmatprep.subr.mxu0 %v101
    %305 = vmatpush1.msra.mxu0 %v100
    %306 = vmatprep.subr.mxu0 0.0
    %307 = vmatpush1.msra.mxu0 0.0
    %308 = vmatprep.subr.mxu0 0.0
    %309 = vmatpush1.msra.mxu0 0.0
    %310 = vmatprep.subr.mxu0 0.0
    %311 = vmatpush1.msra.mxu0 0.0
    %312 = vmatprep.subr.mxu0 0.0
    %313 = vmatpush1.msra.mxu0 0.0
    %314 = vmatprep.subr.mxu0 0.0
    %315 = vmatpush1.msra.mxu0 0.0
    %316 = vmatprep.subr.mxu0 0.0
    %317 = vmatpush1.msra.mxu0 0.0
    %318 = vmatprep.subr.mxu0 0.0
    %319 = vmatpush1.msra.mxu0 0.0
    %320 = vmatprep.subr.mxu0 0.0
    %321 = vmatpush1.msra.mxu0 0.0
    %322 = vmatprep.subr.mxu0 0.0
    %323 = vmatpush1.msra.mxu0 0.0
    %324 = vmatprep.subr.mxu0 0.0
    %325 = vmatpush1.msra.mxu0 0.0
    %326 = vmatprep.subr.mxu0 0.0
    %327 = vmatpush1.msra.mxu0 0.0
    %328 = vmatprep.subr.mxu0 0.0
    %329 = vmatpush1.msra.mxu0 0.0
    %330 = vmatprep.subr.mxu0 0.0
    %331 = vmatpush1.msra.mxu0 0.0
    %332 = vmatprep.subr.mxu0 0.0
    %333 = vmatpush1.msra.mxu0 0.0
    %334 = vmatprep.subr.mxu0 0.0
    %335 = vmatpush1.msra.mxu0 0.0
    %336 = vmatprep.subr.mxu0 0.0
    %337 = vmatpush1.msra.mxu0 0.0
    %338 = vmatprep.mubr.f32.mxu0 0.0
    %339 = vmatmul.mubr.f32.gmra.mrb[0].mxu0 %v269
    %v340 = vpop.f32.mrb[0].mxu0
    %v341 = vadd.f32 0.0, %v340
    %v342 = vpop.f32.mrb[0].mxu0
    %v343 = vadd.f32 0.0, %v342
    %344 = vdwg.mxu0
    %345 = vmatprep.subr.mxu0 0.0
    %346 = vmatpush1.msra.mxu0 %v57
    %347 = vmatprep.subr.mxu0 0.0
    %348 = vmatpush1.msra.mxu0 %v60
    %349 = vmatprep.subr.mxu0 0.0
    %350 = vmatpush1.msra.mxu0 %v63
    %351 = vmatprep.subr.mxu0 0.0
    %352 = vmatpush1.msra.mxu0 %v66
    %353 = vmatprep.subr.mxu0 0.0
    %354 = vmatpush1.msra.mxu0 %v69
    %355 = vmatprep.subr.mxu0 0.0
    %356 = vmatpush1.msra.mxu0 %v72
    %357 = vmatprep.subr.mxu0 0.0
    %358 = vmatpush1.msra.mxu0 %v75
    %359 = vmatprep.subr.mxu0 0.0
    %360 = vmatpush1.msra.mxu0 %v78
    %361 = vmatprep.subr.mxu0 0.0
    %362 = vmatpush1.msra.mxu0 %v81
    %363 = vmatprep.subr.mxu0 0.0
    %364 = vmatpush1.msra.mxu0 %v84
    %365 = vmatprep.subr.mxu0 0.0
    %366 = vmatpush1.msra.mxu0 %v87
    %367 = vmatprep.subr.mxu0 0.0
    %368 = vmatpush1.msra.mxu0 %v90
    %369 = vmatprep.subr.mxu0 0.0
    %370 = vmatpush1.msra.mxu0 %v93
    %371 = vmatprep.subr.mxu0 0.0
    %372 = vmatpush1.msra.mxu0 %v96
    %373 = vmatprep.subr.mxu0 0.0
    %374 = vmatpush1.msra.mxu0 %v99
    %375 = vmatprep.subr.mxu0 0.0
    %376 = vmatpush1.msra.mxu0 %v102
    %377 = vmatprep.subr.mxu0 0.0
    %378 = vmatpush1.msra.mxu0 0.0
    %379 = vmatprep.subr.mxu0 0.0
    %380 = vmatpush1.msra.mxu0 0.0
    %381 = vmatprep.subr.mxu0 0.0
    %382 = vmatpush1.msra.mxu0 0.0
    %383 = vmatprep.subr.mxu0 0.0
    %384 = vmatpush1.msra.mxu0 0.0
    %385 = vmatprep.subr.mxu0 0.0
    %386 = vmatpush1.msra.mxu0 0.0
    %387 = vmatprep.subr.mxu0 0.0
    %388 = vmatpush1.msra.mxu0 0.0
    %389 = vmatprep.subr.mxu0 0.0
    %390 = vmatpush1.msra.mxu0 0.0
    %391 = vmatprep.subr.mxu0 0.0
    %392 = vmatpush1.msra.mxu0 0.0
    %393 = vmatprep.subr.mxu0 0.0
    %394 = vmatpush1.msra.mxu0 0.0
    %395 = vmatprep.subr.mxu0 0.0
    %396 = vmatpush1.msra.mxu0 0.0
    %397 = vmatprep.subr.mxu0 0.0
    %398 = vmatpush1.msra.mxu0 0.0
    %399 = vmatprep.subr.mxu0 0.0
    %400 = vmatpush1.msra.mxu0 0.0
    %401 = vmatprep.subr.mxu0 0.0
    %402 = vmatpush1.msra.mxu0 0.0
    %403 = vmatprep.subr.mxu0 0.0
    %404 = vmatpush1.msra.mxu0 0.0
    %405 = vmatprep.subr.mxu0 0.0
    %406 = vmatpush1.msra.mxu0 0.0
    %407 = vmatprep.subr.mxu0 0.0
    %408 = vmatpush1.msra.mxu0 0.0
    %409 = vmatprep.mubr.f32.mxu0 0.0
    %410 = vmatmul.mubr.f32.gmra.mrb[0].mxu0 %v269
    %v411 = vpop.f32.mrb[0].mxu0
    %v412 = vadd.f32 0.0, %v411
    %v413 = vpop.f32.mrb[0].mxu0
    %414 = vdwg.mxu0
    %v415 = vadd.f32 %v271, %v341
    %v416 = vxor.u32 %v415, 2147483648
    %v417 = vmul.f32 %v416, 1.442695
    %v418 = vpow.pop %v417
    %v419 = vadd.f32 %v418, 1.0
    %v420 = vrcp.pop %v419
    %v421 = vmul.f32 1.0, %v420
    %v422 = vadd.f32 %v272, %v343
    %v423 = vxor.u32 %v422, 2147483648
    %v424 = vmul.f32 %v423, 1.442695
    %v425 = vpow.pop %v424
    %v426 = vadd.f32 %v425, 1.0
    %v427 = vrcp.pop %v426
    %v428 = vmul.f32 1.0, %v427
    %v429 = vadd.f32 %v412, %v53
    %v430 = vmul.f32 %v421, %v429
    %v431 = vadd.f32 %v273, %v430
    %v432 = vtanh.pop %v431
    %v433 = vsub.f32 1.0, %v428
    %v434 = vmul.f32 %v433, %v432
    %v435 = vmul.f32 %v428, %v269
    %v436 = vadd.f32 %v434, %v435
    %s437 = scalar_lea.vmem [#allocation3], 48
    %v438 = vld [vmem:[%s437] sm:$0xff]
    %v439 = vld [vmem:[%s437 + $0x8] sm:$0xff]
    %v440 = vld [vmem:[%s437 + $0x10] sm:$0xff]
    %441 = vmatprep.subr.mxu0 %v56
    %442 = vmatpush1.msra.mxu0 %v55
    %443 = vmatprep.subr.mxu0 %v59
    %444 = vmatpush1.msra.mxu0 %v58
    %445 = vmatprep.subr.mxu0 %v62
    %446 = vmatpush1.msra.mxu0 %v61
    %447 = vmatprep.subr.mxu0 %v65
    %448 = vmatpush1.msra.mxu0 %v64
    %449 = vmatprep.subr.mxu0 %v68
    %450 = vmatpush1.msra.mxu0 %v67
    %451 = vmatprep.subr.mxu0 %v71
    %452 = vmatpush1.msra.mxu0 %v70
    %453 = vmatprep.subr.mxu0 %v74
    %454 = vmatpush1.msra.mxu0 %v73
    %455 = vmatprep.subr.mxu0 %v77
    %456 = vmatpush1.msra.mxu0 %v76
    %457 = vmatprep.subr.mxu0 %v80
    %458 = vmatpush1.msra.mxu0 %v79
    %459 = vmatprep.subr.mxu0 %v83
    %460 = vmatpush1.msra.mxu0 %v82
    %461 = vmatprep.subr.mxu0 %v86
    %462 = vmatpush1.msra.mxu0 %v85
    %463 = vmatprep.subr.mxu0 %v89
    %464 = vmatpush1.msra.mxu0 %v88
    %465 = vmatprep.subr.mxu0 %v92
    %466 = vmatpush1.msra.mxu0 %v91
    %467 = vmatprep.subr.mxu0 %v95
    %468 = vmatpush1.msra.mxu0 %v94
    %469 = vmatprep.subr.mxu0 %v98
    %470 = vmatpush1.msra.mxu0 %v97
    %471 = vmatprep.subr.mxu0 %v101
    %472 = vmatpush1.msra.mxu0 %v100
    %473 = vmatprep.subr.mxu0 0.0
    %474 = vmatpush1.msra.mxu0 0.0
    %475 = vmatprep.subr.mxu0 0.0
    %476 = vmatpush1.msra.mxu0 0.0
    %477 = vmatprep.subr.mxu0 0.0
    %478 = vmatpush1.msra.mxu0 0.0
    %479 = vmatprep.subr.mxu0 0.0
    %480 = vmatpush1.msra.mxu0 0.0
    %481 = vmatprep.subr.mxu0 0.0
    %482 = vmatpush1.msra.mxu0 0.0
    %483 = vmatprep.subr.mxu0 0.0
    %484 = vmatpush1.msra.mxu0 0.0
    %485 = vmatprep.subr.mxu0 0.0
    %486 = vmatpush1.msra.mxu0 0.0
    %487 = vmatprep.subr.mxu0 0.0
    %488 = vmatpush1.msra.mxu0 0.0
    %489 = vmatprep.subr.mxu0 0.0
    %490 = vmatpush1.msra.mxu0 0.0
    %491 = vmatprep.subr.mxu0 0.0
    %492 = vmatpush1.msra.mxu0 0.0
    %493 = vmatprep.subr.mxu0 0.0
    %494 = vmatpush1.msra.mxu0 0.0
    %495 = vmatprep.subr.mxu0 0.0
    %496 = vmatpush1.msra.mxu0 0.0
    %497 = vmatprep.subr.mxu0 0.0
    %498 = vmatpush1.msra.mxu0 0.0
    %499 = vmatprep.subr.mxu0 0.0
    %500 = vmatpush1.msra.mxu0 0.0
    %501 = vmatprep.subr.mxu0 0.0
    %502 = vmatpush1.msra.mxu0 0.0
    %503 = vmatprep.subr.mxu0 0.0
    %504 = vmatpush1.msra.mxu0 0.0
    %505 = vmatprep.mubr.f32.mxu0 0.0
    %506 = vmatmul.mubr.f32.gmra.mrb[0].mxu0 %v436
    %v507 = vpop.f32.mrb[0].mxu0
    %v508 = vadd.f32 0.0, %v507
    %v509 = vpop.f32.mrb[0].mxu0
    %v510 = vadd.f32 0.0, %v509
    %511 = vdwg.mxu0
    %512 = vmatprep.subr.mxu0 0.0
    %513 = vmatpush1.msra.mxu0 %v57
    %514 = vmatprep.subr.mxu0 0.0
    %515 = vmatpush1.msra.mxu0 %v60
    %516 = vmatprep.subr.mxu0 0.0
    %517 = vmatpush1.msra.mxu0 %v63
    %518 = vmatprep.subr.mxu0 0.0
    %519 = vmatpush1.msra.mxu0 %v66
    %520 = vmatprep.subr.mxu0 0.0
    %521 = vmatpush1.msra.mxu0 %v69
    %522 = vmatprep.subr.mxu0 0.0
    %523 = vmatpush1.msra.mxu0 %v72
    %524 = vmatprep.subr.mxu0 0.0
    %525 = vmatpush1.msra.mxu0 %v75
    %526 = vmatprep.subr.mxu0 0.0
    %527 = vmatpush1.msra.mxu0 %v78
    %528 = vmatprep.subr.mxu0 0.0
    %529 = vmatpush1.msra.mxu0 %v81
    %530 = vmatprep.subr.mxu0 0.0
    %531 = vmatpush1.msra.mxu0 %v84
    %532 = vmatprep.subr.mxu0 0.0
    %533 = vmatpush1.msra.mxu0 %v87
    %534 = vmatprep.subr.mxu0 0.0
    %535 = vmatpush1.msra.mxu0 %v90
    %536 = vmatprep.subr.mxu0 0.0
    %537 = vmatpush1.msra.mxu0 %v93
    %538 = vmatprep.subr.mxu0 0.0
    %539 = vmatpush1.msra.mxu0 %v96
    %540 = vmatprep.subr.mxu0 0.0
    %541 = vmatpush1.msra.mxu0 %v99
    %542 = vmatprep.subr.mxu0 0.0
    %543 = vmatpush1.msra.mxu0 %v102
    %544 = vmatprep.subr.mxu0 0.0
    %545 = vmatpush1.msra.mxu0 0.0
    %546 = vmatprep.subr.mxu0 0.0
    %547 = vmatpush1.msra.mxu0 0.0
    %548 = vmatprep.subr.mxu0 0.0
    %549 = vmatpush1.msra.mxu0 0.0
    %550 = vmatprep.subr.mxu0 0.0
    %551 = vmatpush1.msra.mxu0 0.0
    %552 = vmatprep.subr.mxu0 0.0
    %553 = vmatpush1.msra.mxu0 0.0
    %554 = vmatprep.subr.mxu0 0.0
    %555 = vmatpush1.msra.mxu0 0.0
    %556 = vmatprep.subr.mxu0 0.0
    %557 = vmatpush1.msra.mxu0 0.0
    %558 = vmatprep.subr.mxu0 0.0
    %559 = vmatpush1.msra.mxu0 0.0
    %560 = vmatprep.subr.mxu0 0.0
    %561 = vmatpush1.msra.mxu0 0.0
    %562 = vmatprep.subr.mxu0 0.0
    %563 = vmatpush1.msra.mxu0 0.0
    %564 = vmatprep.subr.mxu0 0.0
    %565 = vmatpush1.msra.mxu0 0.0
    %566 = vmatprep.subr.mxu0 0.0
    %567 = vmatpush1.msra.mxu0 0.0
    %568 = vmatprep.subr.mxu0 0.0
    %569 = vmatpush1.msra.mxu0 0.0
    %570 = vmatprep.subr.mxu0 0.0
    %571 = vmatpush1.msra.mxu0 0.0
    %572 = vmatprep.subr.mxu0 0.0
    %573 = vmatpush1.msra.mxu0 0.0
    %574 = vmatprep.subr.mxu0 0.0
    %575 = vmatpush1.msra.mxu0 0.0
    %576 = vmatprep.mubr.f32.mxu0 0.0
    %577 = vmatmul.mubr.f32.gmra.mrb[0].mxu0 %v436
    %v578 = vpop.f32.mrb[0].mxu0
    %v579 = vadd.f32 0.0, %v578
    %v580 = vpop.f32.mrb[0].mxu0
    %581 = vdwg.mxu0
    %v582 = vadd.f32 %v438, %v508
    %v583 = vxor.u32 %v582, 2147483648
    %v584 = vmul.f32 %v583, 1.442695
    %v585 = vpow.pop %v584
    %v586 = vadd.f32 %v585, 1.0
    %v587 = vrcp.pop %v586
    %v588 = vmul.f32 1.0, %v587
    %v589 = vadd.f32 %v439, %v510
    %v590 = vxor.u32 %v589, 2147483648
    %v591 = vmul.f32 %v590, 1.442695
    %v592 = vpow.pop %v591
    %v593 = vadd.f32 %v592, 1.0
    %v594 = vrcp.pop %v593
    %v595 = vmul.f32 1.0, %v594
    %v596 = vadd.f32 %v579, %v53
    %v597 = vmul.f32 %v588, %v596
    %v598 = vadd.f32 %v440, %v597
    %v599 = vtanh.pop %v598
    %v600 = vsub.f32 1.0, %v595
    %v601 = vmul.f32 %v600, %v599
    %v602 = vmul.f32 %v595, %v436
    %v603 = vadd.f32 %v601, %v602
    %s604 = scalar_lea.vmem [#allocation3], 72
    %v605 = vld [vmem:[%s604] sm:$0xff]
    %v606 = vld [vmem:[%s604 + $0x8] sm:$0xff]
    %v607 = vld [vmem:[%s604 + $0x10] sm:$0xff]
    %608 = vmatprep.subr.mxu0 %v56
    %609 = vmatpush1.msra.mxu0 %v55
    %610 = vmatprep.subr.mxu0 %v59
    %611 = vmatpush1.msra.mxu0 %v58
    %612 = vmatprep.subr.mxu0 %v62
    %613 = vmatpush1.msra.mxu0 %v61
    %614 = vmatprep.subr.mxu0 %v65
    %615 = vmatpush1.msra.mxu0 %v64
    %616 = vmatprep.subr.mxu0 %v68
    %617 = vmatpush1.msra.mxu0 %v67
    %618 = vmatprep.subr.mxu0 %v71
    %619 = vmatpush1.msra.mxu0 %v70
    %620 = vmatprep.subr.mxu0 %v74
    %621 = vmatpush1.msra.mxu0 %v73
    %622 = vmatprep.subr.mxu0 %v77
    %623 = vmatpush1.msra.mxu0 %v76
    %624 = vmatprep.subr.mxu0 %v80
    %625 = vmatpush1.msra.mxu0 %v79
    %626 = vmatprep.subr.mxu0 %v83
    %627 = vmatpush1.msra.mxu0 %v82
    %628 = vmatprep.subr.mxu0 %v86
    %629 = vmatpush1.msra.mxu0 %v85
    %630 = vmatprep.subr.mxu0 %v89
    %631 = vmatpush1.msra.mxu0 %v88
    %632 = vmatprep.subr.mxu0 %v92
    %633 = vmatpush1.msra.mxu0 %v91
    %634 = vmatprep.subr.mxu0 %v95
    %635 = vmatpush1.msra.mxu0 %v94
    %636 = vmatprep.subr.mxu0 %v98
    %637 = vmatpush1.msra.mxu0 %v97
    %638 = vmatprep.subr.mxu0 %v101
    %639 = vmatpush1.msra.mxu0 %v100
    %640 = vmatprep.subr.mxu0 0.0
    %641 = vmatpush1.msra.mxu0 0.0
    %642 = vmatprep.subr.mxu0 0.0
    %643 = vmatpush1.msra.mxu0 0.0
    %644 = vmatprep.subr.mxu0 0.0
    %645 = vmatpush1.msra.mxu0 0.0
    %646 = vmatprep.subr.mxu0 0.0
    %647 = vmatpush1.msra.mxu0 0.0
    %648 = vmatprep.subr.mxu0 0.0
    %649 = vmatpush1.msra.mxu0 0.0
    %650 = vmatprep.subr.mxu0 0.0
    %651 = vmatpush1.msra.mxu0 0.0
    %652 = vmatprep.subr.mxu0 0.0
    %653 = vmatpush1.msra.mxu0 0.0
    %654 = vmatprep.subr.mxu0 0.0
    %655 = vmatpush1.msra.mxu0 0.0
    %656 = vmatprep.subr.mxu0 0.0
    %657 = vmatpush1.msra.mxu0 0.0
    %658 = vmatprep.subr.mxu0 0.0
    %659 = vmatpush1.msra.mxu0 0.0
    %660 = vmatprep.subr.mxu0 0.0
    %661 = vmatpush1.msra.mxu0 0.0
    %662 = vmatprep.subr.mxu0 0.0
    %663 = vmatpush1.msra.mxu0 0.0
    %664 = vmatprep.subr.mxu0 0.0
    %665 = vmatpush1.msra.mxu0 0.0
    %666 = vmatprep.subr.mxu0 0.0
    %667 = vmatpush1.msra.mxu0 0.0
    %668 = vmatprep.subr.mxu0 0.0
    %669 = vmatpush1.msra.mxu0 0.0
    %670 = vmatprep.subr.mxu0 0.0
    %671 = vmatpush1.msra.mxu0 0.0
    %672 = vmatprep.mubr.f32.mxu0 0.0
    %673 = vmatmul.mubr.f32.gmra.mrb[0].mxu0 %v603
    %v674 = vpop.f32.mrb[0].mxu0
    %v675 = vadd.f32 0.0, %v674
    %v676 = vpop.f32.mrb[0].mxu0
    %v677 = vadd.f32 0.0, %v676
    %678 = vdwg.mxu0
    %679 = vmatprep.subr.mxu0 0.0
    %680 = vmatpush1.msra.mxu0 %v57
    %681 = vmatprep.subr.mxu0 0.0
    %682 = vmatpush1.msra.mxu0 %v60
    %683 = vmatprep.subr.mxu0 0.0
    %684 = vmatpush1.msra.mxu0 %v63
    %685 = vmatprep.subr.mxu0 0.0
    %686 = vmatpush1.msra.mxu0 %v66
    %687 = vmatprep.subr.mxu0 0.0
    %688 = vmatpush1.msra.mxu0 %v69
    %689 = vmatprep.subr.mxu0 0.0
    %690 = vmatpush1.msra.mxu0 %v72
    %691 = vmatprep.subr.mxu0 0.0
    %692 = vmatpush1.msra.mxu0 %v75
    %693 = vmatprep.subr.mxu0 0.0
    %694 = vmatpush1.msra.mxu0 %v78
    %695 = vmatprep.subr.mxu0 0.0
    %696 = vmatpush1.msra.mxu0 %v81
    %697 = vmatprep.subr.mxu0 0.0
    %698 = vmatpush1.msra.mxu0 %v84
    %699 = vmatprep.subr.mxu0 0.0
    %700 = vmatpush1.msra.mxu0 %v87
    %701 = vmatprep.subr.mxu0 0.0
    %702 = vmatpush1.msra.mxu0 %v90
    %703 = vmatprep.subr.mxu0 0.0
    %704 = vmatpush1.msra.mxu0 %v93
    %705 = vmatprep.subr.mxu0 0.0
    %706 = vmatpush1.msra.mxu0 %v96
    %707 = vmatprep.subr.mxu0 0.0
    %708 = vmatpush1.msra.mxu0 %v99
    %709 = vmatprep.subr.mxu0 0.0
    %710 = vmatpush1.msra.mxu0 %v102
    %711 = vmatprep.subr.mxu0 0.0
    %712 = vmatpush1.msra.mxu0 0.0
    %713 = vmatprep.subr.mxu0 0.0
    %714 = vmatpush1.msra.mxu0 0.0
    %715 = vmatprep.subr.mxu0 0.0
    %716 = vmatpush1.msra.mxu0 0.0
    %717 = vmatprep.subr.mxu0 0.0
    %718 = vmatpush1.msra.mxu0 0.0
    %719 = vmatprep.subr.mxu0 0.0
    %720 = vmatpush1.msra.mxu0 0.0
    %721 = vmatprep.subr.mxu0 0.0
    %722 = vmatpush1.msra.mxu0 0.0
    %723 = vmatprep.subr.mxu0 0.0
    %724 = vmatpush1.msra.mxu0 0.0
    %725 = vmatprep.subr.mxu0 0.0
    %726 = vmatpush1.msra.mxu0 0.0
    %727 = vmatprep.subr.mxu0 0.0
    %728 = vmatpush1.msra.mxu0 0.0
    %729 = vmatprep.subr.mxu0 0.0
    %730 = vmatpush1.msra.mxu0 0.0
    %731 = vmatprep.subr.mxu0 0.0
    %732 = vmatpush1.msra.mxu0 0.0
    %733 = vmatprep.subr.mxu0 0.0
    %734 = vmatpush1.msra.mxu0 0.0
    %735 = vmatprep.subr.mxu0 0.0
    %736 = vmatpush1.msra.mxu0 0.0
    %737 = vmatprep.subr.mxu0 0.0
    %738 = vmatpush1.msra.mxu0 0.0
    %739 = vmatprep.subr.mxu0 0.0
    %740 = vmatpush1.msra.mxu0 0.0
    %741 = vmatprep.subr.mxu0 0.0
    %742 = vmatpush1.msra.mxu0 0.0
    %743 = vmatprep.mubr.f32.mxu0 0.0
    %744 = vmatmul.mubr.f32.gmra.mrb[0].mxu0 %v603
    %v745 = vpop.f32.mrb[0].mxu0
    %v746 = vadd.f32 0.0, %v745
    %v747 = vpop.f32.mrb[0].mxu0
    %748 = vdwg.mxu0
    %v749 = vadd.f32 %v605, %v675
    %v750 = vxor.u32 %v749, 2147483648
    %v751 = vmul.f32 %v750, 1.442695
    %v752 = vpow.pop %v751
    %v753 = vadd.f32 %v752, 1.0
    %v754 = vrcp.pop %v753
    %v755 = vmul.f32 1.0, %v754
    %v756 = vadd.f32 %v606, %v677
    %v757 = vxor.u32 %v756, 2147483648
    %v758 = vmul.f32 %v757, 1.442695
    %v759 = vpow.pop %v758
    %v760 = vadd.f32 %v759, 1.0
    %v761 = vrcp.pop %v760
    %v762 = vmul.f32 1.0, %v761
    %v763 = vadd.f32 %v746, %v53
    %v764 = vmul.f32 %v755, %v763
    %v765 = vadd.f32 %v607, %v764
    %v766 = vtanh.pop %v765
    %v767 = vsub.f32 1.0, %v762
    %v768 = vmul.f32 %v767, %v766
    %v769 = vmul.f32 %v762, %v603
    %v770 = vadd.f32 %v768, %v769
    %s771 = scalar_lea.vmem [#allocation3], 96
    %v772 = vld [vmem:[%s771] sm:$0xff]
    %v773 = vld [vmem:[%s771 + $0x8] sm:$0xff]
    %v774 = vld [vmem:[%s771 + $0x10] sm:$0xff]
    %775 = vmatprep.subr.mxu0 %v56
    %776 = vmatpush1.msra.mxu0 %v55
    %777 = vmatprep.subr.mxu0 %v59
    %778 = vmatpush1.msra.mxu0 %v58
    %779 = vmatprep.subr.mxu0 %v62
    %780 = vmatpush1.msra.mxu0 %v61
    %781 = vmatprep.subr.mxu0 %v65
    %782 = vmatpush1.msra.mxu0 %v64
    %783 = vmatprep.subr.mxu0 %v68
    %784 = vmatpush1.msra.mxu0 %v67
    %785 = vmatprep.subr.mxu0 %v71
    %786 = vmatpush1.msra.mxu0 %v70
    %787 = vmatprep.subr.mxu0 %v74
    %788 = vmatpush1.msra.mxu0 %v73
    %789 = vmatprep.subr.mxu0 %v77
    %790 = vmatpush1.msra.mxu0 %v76
    %791 = vmatprep.subr.mxu0 %v80
    %792 = vmatpush1.msra.mxu0 %v79
    %793 = vmatprep.subr.mxu0 %v83
    %794 = vmatpush1.msra.mxu0 %v82
    %795 = vmatprep.subr.mxu0 %v86
    %796 = vmatpush1.msra.mxu0 %v85
    %797 = vmatprep.subr.mxu0 %v89
    %798 = vmatpush1.msra.mxu0 %v88
    %799 = vmatprep.subr.mxu0 %v92
    %800 = vmatpush1.msra.mxu0 %v91
    %801 = vmatprep.subr.mxu0 %v95
    %802 = vmatpush1.msra.mxu0 %v94
    %803 = vmatprep.subr.mxu0 %v98
    %804 = vmatpush1.msra.mxu0 %v97
    %805 = vmatprep.subr.mxu0 %v101
    %806 = vmatpush1.msra.mxu0 %v100
    %807 = vmatprep.subr.mxu0 0.0
    %808 = vmatpush1.msra.mxu0 0.0
    %809 = vmatprep.subr.mxu0 0.0
    %810 = vmatpush1.msra.mxu0 0.0
    %811 = vmatprep.subr.mxu0 0.0
    %812 = vmatpush1.msra.mxu0 0.0
    %813 = vmatprep.subr.mxu0 0.0
    %814 = vmatpush1.msra.mxu0 0.0
    %815 = vmatprep.subr.mxu0 0.0
    %816 = vmatpush1.msra.mxu0 0.0
    %817 = vmatprep.subr.mxu0 0.0
    %818 = vmatpush1.msra.mxu0 0.0
    %819 = vmatprep.subr.mxu0 0.0
    %820 = vmatpush1.msra.mxu0 0.0
    %821 = vmatprep.subr.mxu0 0.0
    %822 = vmatpush1.msra.mxu0 0.0
    %823 = vmatprep.subr.mxu0 0.0
    %824 = vmatpush1.msra.mxu0 0.0
    %825 = vmatprep.subr.mxu0 0.0
    %826 = vmatpush1.msra.mxu0 0.0
    %827 = vmatprep.subr.mxu0 0.0
    %828 = vmatpush1.msra.mxu0 0.0
    %829 = vmatprep.subr.mxu0 0.0
    %830 = vmatpush1.msra.mxu0 0.0
    %831 = vmatprep.subr.mxu0 0.0
    %832 = vmatpush1.msra.mxu0 0.0
    %833 = vmatprep.subr.mxu0 0.0
    %834 = vmatpush1.msra.mxu0 0.0
    %835 = vmatprep.subr.mxu0 0.0
    %836 = vmatpush1.msra.mxu0 0.0
    %837 = vmatprep.subr.mxu0 0.0
    %838 = vmatpush1.msra.mxu0 0.0
    %839 = vmatprep.mubr.f32.mxu0 0.0
    %840 = vmatmul.mubr.f32.gmra.mrb[0].mxu0 %v770
    %v841 = vpop.f32.mrb[0].mxu0
    %v842 = vadd.f32 0.0, %v841
    %v843 = vpop.f32.mrb[0].mxu0
    %v844 = vadd.f32 0.0, %v843
    %845 = vdwg.mxu0
    %846 = vmatprep.subr.mxu0 0.0
    %847 = vmatpush1.msra.mxu0 %v57
    %848 = vmatprep.subr.mxu0 0.0
    %849 = vmatpush1.msra.mxu0 %v60
    %850 = vmatprep.subr.mxu0 0.0
    %851 = vmatpush1.msra.mxu0 %v63
    %852 = vmatprep.subr.mxu0 0.0
    %853 = vmatpush1.msra.mxu0 %v66
    %854 = vmatprep.subr.mxu0 0.0
    %855 = vmatpush1.msra.mxu0 %v69
    %856 = vmatprep.subr.mxu0 0.0
    %857 = vmatpush1.msra.mxu0 %v72
    %858 = vmatprep.subr.mxu0 0.0
    %859 = vmatpush1.msra.mxu0 %v75
    %860 = vmatprep.subr.mxu0 0.0
    %861 = vmatpush1.msra.mxu0 %v78
    %862 = vmatprep.subr.mxu0 0.0
    %863 = vmatpush1.msra.mxu0 %v81
    %864 = vmatprep.subr.mxu0 0.0
    %865 = vmatpush1.msra.mxu0 %v84
    %866 = vmatprep.subr.mxu0 0.0
    %867 = vmatpush1.msra.mxu0 %v87
    %868 = vmatprep.subr.mxu0 0.0
    %869 = vmatpush1.msra.mxu0 %v90
    %870 = vmatprep.subr.mxu0 0.0
    %871 = vmatpush1.msra.mxu0 %v93
    %872 = vmatprep.subr.mxu0 0.0
    %873 = vmatpush1.msra.mxu0 %v96
    %874 = vmatprep.subr.mxu0 0.0
    %875 = vmatpush1.msra.mxu0 %v99
    %876 = vmatprep.subr.mxu0 0.0
    %877 = vmatpush1.msra.mxu0 %v102
    %878 = vmatprep.subr.mxu0 0.0
    %879 = vmatpush1.msra.mxu0 0.0
    %880 = vmatprep.subr.mxu0 0.0
    %881 = vmatpush1.msra.mxu0 0.0
    %882 = vmatprep.subr.mxu0 0.0
    %883 = vmatpush1.msra.mxu0 0.0
    %884 = vmatprep.subr.mxu0 0.0
    %885 = vmatpush1.msra.mxu0 0.0
    %886 = vmatprep.subr.mxu0 0.0
    %887 = vmatpush1.msra.mxu0 0.0
    %888 = vmatprep.subr.mxu0 0.0
    %889 = vmatpush1.msra.mxu0 0.0
    %890 = vmatprep.subr.mxu0 0.0
    %891 = vmatpush1.msra.mxu0 0.0
    %892 = vmatprep.subr.mxu0 0.0
    %893 = vmatpush1.msra.mxu0 0.0
    %894 = vmatprep.subr.mxu0 0.0
    %895 = vmatpush1.msra.mxu0 0.0
    %896 = vmatprep.subr.mxu0 0.0
    %897 = vmatpush1.msra.mxu0 0.0
    %898 = vmatprep.subr.mxu0 0.0
    %899 = vmatpush1.msra.mxu0 0.0
    %900 = vmatprep.subr.mxu0 0.0
    %901 = vmatpush1.msra.mxu0 0.0
    %902 = vmatprep.subr.mxu0 0.0
    %903 = vmatpush1.msra.mxu0 0.0
    %904 = vmatprep.subr.mxu0 0.0
    %905 = vmatpush1.msra.mxu0 0.0
    %906 = vmatprep.subr.mxu0 0.0
    %907 = vmatpush1.msra.mxu0 0.0
    %908 = vmatprep.subr.mxu0 0.0
    %909 = vmatpush1.msra.mxu0 0.0
    %910 = vmatprep.mubr.f32.mxu0 0.0
    %911 = vmatmul.mubr.f32.gmra.mrb[0].mxu0 %v770
    %v912 = vpop.f32.mrb[0].mxu0
    %v913 = vadd.f32 0.0, %v912
    %v914 = vpop.f32.mrb[0].mxu0
    %915 = vdwg.mxu0
    %v916 = vadd.f32 %v772, %v842
    %v917 = vxor.u32 %v916, 2147483648
    %v918 = vmul.f32 %v917, 1.442695
    %v919 = vpow.pop %v918
    %v920 = vadd.f32 %v919, 1.0
    %v921 = vrcp.pop %v920
    %v922 = vmul.f32 1.0, %v921
    %v923 = vadd.f32 %v773, %v844
    %v924 = vxor.u32 %v923, 2147483648
    %v925 = vmul.f32 %v924, 1.442695
    %v926 = vpow.pop %v925
    %v927 = vadd.f32 %v926, 1.0
    %v928 = vrcp.pop %v927
    %v929 = vmul.f32 1.0, %v928
    %v930 = vadd.f32 %v913, %v53
    %v931 = vmul.f32 %v922, %v930
    %v932 = vadd.f32 %v774, %v931
    %v933 = vtanh.pop %v932
    %v934 = vsub.f32 1.0, %v929
    %v935 = vmul.f32 %v934, %v933
    %v936 = vmul.f32 %v929, %v770
    %v937 = vadd.f32 %v935, %v936
    %s938 = scalar_lea.vmem [#allocation3], 120
    %v939 = vld [vmem:[%s938] sm:$0xff]
    %v940 = vld [vmem:[%s938 + $0x8] sm:$0xff]
    %v941 = vld [vmem:[%s938 + $0x10] sm:$0xff]
    %942 = vmatprep.subr.mxu0 %v56
    %943 = vmatpush1.msra.mxu0 %v55
    %944 = vmatprep.subr.mxu0 %v59
    %945 = vmatpush1.msra.mxu0 %v58
    %946 = vmatprep.subr.mxu0 %v62
    %947 = vmatpush1.msra.mxu0 %v61
    %948 = vmatprep.subr.mxu0 %v65
    %949 = vmatpush1.msra.mxu0 %v64
    %950 = vmatprep.subr.mxu0 %v68
    %951 = vmatpush1.msra.mxu0 %v67
    %952 = vmatprep.subr.mxu0 %v71
    %953 = vmatpush1.msra.mxu0 %v70
    %954 = vmatprep.subr.mxu0 %v74
    %955 = vmatpush1.msra.mxu0 %v73
    %956 = vmatprep.subr.mxu0 %v77
    %957 = vmatpush1.msra.mxu0 %v76
    %958 = vmatprep.subr.mxu0 %v80
    %959 = vmatpush1.msra.mxu0 %v79
    %960 = vmatprep.subr.mxu0 %v83
    %961 = vmatpush1.msra.mxu0 %v82
    %962 = vmatprep.subr.mxu0 %v86
    %963 = vmatpush1.msra.mxu0 %v85
    %964 = vmatprep.subr.mxu0 %v89
    %965 = vmatpush1.msra.mxu0 %v88
    %966 = vmatprep.subr.mxu0 %v92
    %967 = vmatpush1.msra.mxu0 %v91
    %968 = vmatprep.subr.mxu0 %v95
    %969 = vmatpush1.msra.mxu0 %v94
    %970 = vmatprep.subr.mxu0 %v98
    %971 = vmatpush1.msra.mxu0 %v97
    %972 = vmatprep.subr.mxu0 %v101
    %973 = vmatpush1.msra.mxu0 %v100
    %974 = vmatprep.subr.mxu0 0.0
    %975 = vmatpush1.msra.mxu0 0.0
    %976 = vmatprep.subr.mxu0 0.0
    %977 = vmatpush1.msra.mxu0 0.0
    %978 = vmatprep.subr.mxu0 0.0
    %979 = vmatpush1.msra.mxu0 0.0
    %980 = vmatprep.subr.mxu0 0.0
    %981 = vmatpush1.msra.mxu0 0.0
    %982 = vmatprep.subr.mxu0 0.0
    %983 = vmatpush1.msra.mxu0 0.0
    %984 = vmatprep.subr.mxu0 0.0
    %985 = vmatpush1.msra.mxu0 0.0
    %986 = vmatprep.subr.mxu0 0.0
    %987 = vmatpush1.msra.mxu0 0.0
    %988 = vmatprep.subr.mxu0 0.0
    %989 = vmatpush1.msra.mxu0 0.0
    %990 = vmatprep.subr.mxu0 0.0
    %991 = vmatpush1.msra.mxu0 0.0
    %992 = vmatprep.subr.mxu0 0.0
    %993 = vmatpush1.msra.mxu0 0.0
    %994 = vmatprep.subr.mxu0 0.0
    %995 = vmatpush1.msra.mxu0 0.0
    %996 = vmatprep.subr.mxu0 0.0
    %997 = vmatpush1.msra.mxu0 0.0
    %998 = vmatprep.subr.mxu0 0.0
    %999 = vmatpush1.msra.mxu0 0.0
    %1000 = vmatprep.subr.mxu0 0.0
    %1001 = vmatpush1.msra.mxu0 0.0
    %1002 = vmatprep.subr.mxu0 0.0
    %1003 = vmatpush1.msra.mxu0 0.0
    %1004 = vmatprep.subr.mxu0 0.0
    %1005 = vmatpush1.msra.mxu0 0.0
    %1006 = vmatprep.mubr.f32.mxu0 0.0
    %1007 = vmatmul.mubr.f32.gmra.mrb[0].mxu0 %v937
    %v1008 = vpop.f32.mrb[0].mxu0
    %v1009 = vadd.f32 0.0, %v1008
    %v1010 = vpop.f32.mrb[0].mxu0
    %v1011 = vadd.f32 0.0, %v1010
    %1012 = vdwg.mxu0
    %1013 = vmatprep.subr.mxu0 0.0
    %1014 = vmatpush1.msra.mxu0 %v57
    %1015 = vmatprep.subr.mxu0 0.0
    %1016 = vmatpush1.msra.mxu0 %v60
    %1017 = vmatprep.subr.mxu0 0.0
    %1018 = vmatpush1.msra.mxu0 %v63
    %1019 = vmatprep.subr.mxu0 0.0
    %1020 = vmatpush1.msra.mxu0 %v66
    %1021 = vmatprep.subr.mxu0 0.0
    %1022 = vmatpush1.msra.mxu0 %v69
    %1023 = vmatprep.subr.mxu0 0.0
    %1024 = vmatpush1.msra.mxu0 %v72
    %1025 = vmatprep.subr.mxu0 0.0
    %1026 = vmatpush1.msra.mxu0 %v75
    %1027 = vmatprep.subr.mxu0 0.0
    %1028 = vmatpush1.msra.mxu0 %v78
    %1029 = vmatprep.subr.mxu0 0.0
    %1030 = vmatpush1.msra.mxu0 %v81
    %1031 = vmatprep.subr.mxu0 0.0
    %1032 = vmatpush1.msra.mxu0 %v84
    %1033 = vmatprep.subr.mxu0 0.0
    %1034 = vmatpush1.msra.mxu0 %v87
    %1035 = vmatprep.subr.mxu0 0.0
    %1036 = vmatpush1.msra.mxu0 %v90
    %1037 = vmatprep.subr.mxu0 0.0
    %1038 = vmatpush1.msra.mxu0 %v93
    %1039 = vmatprep.subr.mxu0 0.0
    %1040 = vmatpush1.msra.mxu0 %v96
    %1041 = vmatprep.subr.mxu0 0.0
    %1042 = vmatpush1.msra.mxu0 %v99
    %1043 = vmatprep.subr.mxu0 0.0
    %1044 = vmatpush1.msra.mxu0 %v102
    %1045 = vmatprep.subr.mxu0 0.0
    %1046 = vmatpush1.msra.mxu0 0.0
    %1047 = vmatprep.subr.mxu0 0.0
    %1048 = vmatpush1.msra.mxu0 0.0
    %1049 = vmatprep.subr.mxu0 0.0
    %1050 = vmatpush1.msra.mxu0 0.0
    %1051 = vmatprep.subr.mxu0 0.0
    %1052 = vmatpush1.msra.mxu0 0.0
    %1053 = vmatprep.subr.mxu0 0.0
    %1054 = vmatpush1.msra.mxu0 0.0
    %1055 = vmatprep.subr.mxu0 0.0
    %1056 = vmatpush1.msra.mxu0 0.0
    %1057 = vmatprep.subr.mxu0 0.0
    %1058 = vmatpush1.msra.mxu0 0.0
    %1059 = vmatprep.subr.mxu0 0.0
    %1060 = vmatpush1.msra.mxu0 0.0
    %1061 = vmatprep.subr.mxu0 0.0
    %1062 = vmatpush1.msra.mxu0 0.0
    %1063 = vmatprep.subr.mxu0 0.0
    %1064 = vmatpush1.msra.mxu0 0.0
    %1065 = vmatprep.subr.mxu0 0.0
    %1066 = vmatpush1.msra.mxu0 0.0
    %1067 = vmatprep.subr.mxu0 0.0
    %1068 = vmatpush1.msra.mxu0 0.0
    %1069 = vmatprep.subr.mxu0 0.0
    %1070 = vmatpush1.msra.mxu0 0.0
    %1071 = vmatprep.subr.mxu0 0.0
    %1072 = vmatpush1.msra.mxu0 0.0
    %1073 = vmatprep.subr.mxu0 0.0
    %1074 = vmatpush1.msra.mxu0 0.0
    %1075 = vmatprep.subr.mxu0 0.0
    %1076 = vmatpush1.msra.mxu0 0.0
    %1077 = vmatprep.mubr.f32.mxu0 0.0
    %1078 = vmatmul.mubr.f32.gmra.mrb[0].mxu0 %v937
    %v1079 = vpop.f32.mrb[0].mxu0
    %v1080 = vadd.f32 0.0, %v1079
    %v1081 = vpop.f32.mrb[0].mxu0
    %1082 = vdwg.mxu0
    %v1083 = vadd.f32 %v939, %v1009
    %v1084 = vxor.u32 %v1083, 2147483648
    %v1085 = vmul.f32 %v1084, 1.442695
    %v1086 = vpow.pop %v1085
    %v1087 = vadd.f32 %v1086, 1.0
    %v1088 = vrcp.pop %v1087
    %v1089 = vmul.f32 1.0, %v1088
    %v1090 = vadd.f32 %v940, %v1011
    %v1091 = vxor.u32 %v1090, 2147483648
    %v1092 = vmul.f32 %v1091, 1.442695
    %v1093 = vpow.pop %v1092
    %v1094 = vadd.f32 %v1093, 1.0
    %v1095 = vrcp.pop %v1094
    %v1096 = vmul.f32 1.0, %v1095
    %v1097 = vadd.f32 %v1080, %v53
    %v1098 = vmul.f32 %v1089, %v1097
    %v1099 = vadd.f32 %v941, %v1098
    %v1100 = vtanh.pop %v1099
    %v1101 = vsub.f32 1.0, %v1096
    %v1102 = vmul.f32 %v1101, %v1100
    %v1103 = vmul.f32 %v1096, %v937
    %v1104 = vadd.f32 %v1102, %v1103
    %s1105 = scalar_lea.vmem [#allocation3], 144
    %v1106 = vld [vmem:[%s1105] sm:$0xff]
    %v1107 = vld [vmem:[%s1105 + $0x8] sm:$0xff]
    %v1108 = vld [vmem:[%s1105 + $0x10] sm:$0xff]
    %1109 = vmatprep.subr.mxu0 %v56
    %1110 = vmatpush1.msra.mxu0 %v55
    %1111 = vmatprep.subr.mxu0 %v59
    %1112 = vmatpush1.msra.mxu0 %v58
    %1113 = vmatprep.subr.mxu0 %v62
    %1114 = vmatpush1.msra.mxu0 %v61
    %1115 = vmatprep.subr.mxu0 %v65
    %1116 = vmatpush1.msra.mxu0 %v64
    %1117 = vmatprep.subr.mxu0 %v68
    %1118 = vmatpush1.msra.mxu0 %v67
    %1119 = vmatprep.subr.mxu0 %v71
    %1120 = vmatpush1.msra.mxu0 %v70
    %1121 = vmatprep.subr.mxu0 %v74
    %1122 = vmatpush1.msra.mxu0 %v73
    %1123 = vmatprep.subr.mxu0 %v77
    %1124 = vmatpush1.msra.mxu0 %v76
    %1125 = vmatprep.subr.mxu0 %v80
    %1126 = vmatpush1.msra.mxu0 %v79
    %1127 = vmatprep.subr.mxu0 %v83
    %1128 = vmatpush1.msra.mxu0 %v82
    %1129 = vmatprep.subr.mxu0 %v86
    %1130 = vmatpush1.msra.mxu0 %v85
    %1131 = vmatprep.subr.mxu0 %v89
    %1132 = vmatpush1.msra.mxu0 %v88
    %1133 = vmatprep.subr.mxu0 %v92
    %1134 = vmatpush1.msra.mxu0 %v91
    %1135 = vmatprep.subr.mxu0 %v95
    %1136 = vmatpush1.msra.mxu0 %v94
    %1137 = vmatprep.subr.mxu0 %v98
    %1138 = vmatpush1.msra.mxu0 %v97
    %1139 = vmatprep.subr.mxu0 %v101
    %1140 = vmatpush1.msra.mxu0 %v100
    %1141 = vmatprep.subr.mxu0 0.0
    %1142 = vmatpush1.msra.mxu0 0.0
    %1143 = vmatprep.subr.mxu0 0.0
    %1144 = vmatpush1.msra.mxu0 0.0
    %1145 = vmatprep.subr.mxu0 0.0
    %1146 = vmatpush1.msra.mxu0 0.0
    %1147 = vmatprep.subr.mxu0 0.0
    %1148 = vmatpush1.msra.mxu0 0.0
    %1149 = vmatprep.subr.mxu0 0.0
    %1150 = vmatpush1.msra.mxu0 0.0
    %1151 = vmatprep.subr.mxu0 0.0
    %1152 = vmatpush1.msra.mxu0 0.0
    %1153 = vmatprep.subr.mxu0 0.0
    %1154 = vmatpush1.msra.mxu0 0.0
    %1155 = vmatprep.subr.mxu0 0.0
    %1156 = vmatpush1.msra.mxu0 0.0
    %1157 = vmatprep.subr.mxu0 0.0
    %1158 = vmatpush1.msra.mxu0 0.0
    %1159 = vmatprep.subr.mxu0 0.0
    %1160 = vmatpush1.msra.mxu0 0.0
    %1161 = vmatprep.subr.mxu0 0.0
    %1162 = vmatpush1.msra.mxu0 0.0
    %1163 = vmatprep.subr.mxu0 0.0
    %1164 = vmatpush1.msra.mxu0 0.0
    %1165 = vmatprep.subr.mxu0 0.0
    %1166 = vmatpush1.msra.mxu0 0.0
    %1167 = vmatprep.subr.mxu0 0.0
    %1168 = vmatpush1.msra.mxu0 0.0
    %1169 = vmatprep.subr.mxu0 0.0
    %1170 = vmatpush1.msra.mxu0 0.0
    %1171 = vmatprep.subr.mxu0 0.0
    %1172 = vmatpush1.msra.mxu0 0.0
    %1173 = vmatprep.mubr.f32.mxu0 0.0
    %1174 = vmatmul.mubr.f32.gmra.mrb[0].mxu0 %v1104
    %v1175 = vpop.f32.mrb[0].mxu0
    %v1176 = vadd.f32 0.0, %v1175
    %v1177 = vpop.f32.mrb[0].mxu0
    %v1178 = vadd.f32 0.0, %v1177
    %1179 = vdwg.mxu0
    %1180 = vmatprep.subr.mxu0 0.0
    %1181 = vmatpush1.msra.mxu0 %v57
    %1182 = vmatprep.subr.mxu0 0.0
    %1183 = vmatpush1.msra.mxu0 %v60
    %1184 = vmatprep.subr.mxu0 0.0
    %1185 = vmatpush1.msra.mxu0 %v63
    %1186 = vmatprep.subr.mxu0 0.0
    %1187 = vmatpush1.msra.mxu0 %v66
    %1188 = vmatprep.subr.mxu0 0.0
    %1189 = vmatpush1.msra.mxu0 %v69
    %1190 = vmatprep.subr.mxu0 0.0
    %1191 = vmatpush1.msra.mxu0 %v72
    %1192 = vmatprep.subr.mxu0 0.0
    %1193 = vmatpush1.msra.mxu0 %v75
    %1194 = vmatprep.subr.mxu0 0.0
    %1195 = vmatpush1.msra.mxu0 %v78
    %1196 = vmatprep.subr.mxu0 0.0
    %1197 = vmatpush1.msra.mxu0 %v81
    %1198 = vmatprep.subr.mxu0 0.0
    %1199 = vmatpush1.msra.mxu0 %v84
    %1200 = vmatprep.subr.mxu0 0.0
    %1201 = vmatpush1.msra.mxu0 %v87
    %1202 = vmatprep.subr.mxu0 0.0
    %1203 = vmatpush1.msra.mxu0 %v90
    %1204 = vmatprep.subr.mxu0 0.0
    %1205 = vmatpush1.msra.mxu0 %v93
    %1206 = vmatprep.subr.mxu0 0.0
    %1207 = vmatpush1.msra.mxu0 %v96
    %1208 = vmatprep.subr.mxu0 0.0
    %1209 = vmatpush1.msra.mxu0 %v99
    %1210 = vmatprep.subr.mxu0 0.0
    %1211 = vmatpush1.msra.mxu0 %v102
    %1212 = vmatprep.subr.mxu0 0.0
    %1213 = vmatpush1.msra.mxu0 0.0
    %1214 = vmatprep.subr.mxu0 0.0
    %1215 = vmatpush1.msra.mxu0 0.0
    %1216 = vmatprep.subr.mxu0 0.0
    %1217 = vmatpush1.msra.mxu0 0.0
    %1218 = vmatprep.subr.mxu0 0.0
    %1219 = vmatpush1.msra.mxu0 0.0
    %1220 = vmatprep.subr.mxu0 0.0
    %1221 = vmatpush1.msra.mxu0 0.0
    %1222 = vmatprep.subr.mxu0 0.0
    %1223 = vmatpush1.msra.mxu0 0.0
    %1224 = vmatprep.subr.mxu0 0.0
    %1225 = vmatpush1.msra.mxu0 0.0
    %1226 = vmatprep.subr.mxu0 0.0
    %1227 = vmatpush1.msra.mxu0 0.0
    %1228 = vmatprep.subr.mxu0 0.0
    %1229 = vmatpush1.msra.mxu0 0.0
    %1230 = vmatprep.subr.mxu0 0.0
    %1231 = vmatpush1.msra.mxu0 0.0
    %1232 = vmatprep.subr.mxu0 0.0
    %1233 = vmatpush1.msra.mxu0 0.0
    %1234 = vmatprep.subr.mxu0 0.0
    %1235 = vmatpush1.msra.mxu0 0.0
    %1236 = vmatprep.subr.mxu0 0.0
    %1237 = vmatpush1.msra.mxu0 0.0
    %1238 = vmatprep.subr.mxu0 0.0
    %1239 = vmatpush1.msra.mxu0 0.0
    %1240 = vmatprep.subr.mxu0 0.0
    %1241 = vmatpush1.msra.mxu0 0.0
    %1242 = vmatprep.subr.mxu0 0.0
    %1243 = vmatpush1.msra.mxu0 0.0
    %1244 = vmatprep.mubr.f32.mxu0 0.0
    %1245 = vmatmul.mubr.f32.gmra.mrb[0].mxu0 %v1104
    %v1246 = vpop.f32.mrb[0].mxu0
    %v1247 = vadd.f32 0.0, %v1246
    %v1248 = vpop.f32.mrb[0].mxu0
    %1249 = vdwg.mxu0
    %v1250 = vadd.f32 %v1106, %v1176
    %v1251 = vxor.u32 %v1250, 2147483648
    %v1252 = vmul.f32 %v1251, 1.442695
    %v1253 = vpow.pop %v1252
    %v1254 = vadd.f32 %v1253, 1.0
    %v1255 = vrcp.pop %v1254
    %v1256 = vmul.f32 1.0, %v1255
    %v1257 = vadd.f32 %v1107, %v1178
    %v1258 = vxor.u32 %v1257, 2147483648
    %v1259 = vmul.f32 %v1258, 1.442695
    %v1260 = vpow.pop %v1259
    %v1261 = vadd.f32 %v1260, 1.0
    %v1262 = vrcp.pop %v1261
    %v1263 = vmul.f32 1.0, %v1262
    %v1264 = vadd.f32 %v1247, %v53
    %v1265 = vmul.f32 %v1256, %v1264
    %v1266 = vadd.f32 %v1108, %v1265
    %v1267 = vtanh.pop %v1266
    %v1268 = vsub.f32 1.0, %v1263
    %v1269 = vmul.f32 %v1268, %v1267
    %v1270 = vmul.f32 %v1263, %v1104
    %v1271 = vadd.f32 %v1269, %v1270
    %s1272 = scalar_lea.vmem [#allocation3], 168
    %v1273 = vld [vmem:[%s1272] sm:$0xff]
    %v1274 = vld [vmem:[%s1272 + $0x8] sm:$0xff]
    %v1275 = vld [vmem:[%s1272 + $0x10] sm:$0xff]
    %1276 = vmatprep.subr.mxu0 %v56
    %1277 = vmatpush1.msra.mxu0 %v55
    %1278 = vmatprep.subr.mxu0 %v59
    %1279 = vmatpush1.msra.mxu0 %v58
    %1280 = vmatprep.subr.mxu0 %v62
    %1281 = vmatpush1.msra.mxu0 %v61
    %1282 = vmatprep.subr.mxu0 %v65
    %1283 = vmatpush1.msra.mxu0 %v64
    %1284 = vmatprep.subr.mxu0 %v68
    %1285 = vmatpush1.msra.mxu0 %v67
    %1286 = vmatprep.subr.mxu0 %v71
    %1287 = vmatpush1.msra.mxu0 %v70
    %1288 = vmatprep.subr.mxu0 %v74
    %1289 = vmatpush1.msra.mxu0 %v73
    %1290 = vmatprep.subr.mxu0 %v77
    %1291 = vmatpush1.msra.mxu0 %v76
    %1292 = vmatprep.subr.mxu0 %v80
    %1293 = vmatpush1.msra.mxu0 %v79
    %1294 = vmatprep.subr.mxu0 %v83
    %1295 = vmatpush1.msra.mxu0 %v82
    %1296 = vmatprep.subr.mxu0 %v86
    %1297 = vmatpush1.msra.mxu0 %v85
    %1298 = vmatprep.subr.mxu0 %v89
    %1299 = vmatpush1.msra.mxu0 %v88
    %1300 = vmatprep.subr.mxu0 %v92
    %1301 = vmatpush1.msra.mxu0 %v91
    %1302 = vmatprep.subr.mxu0 %v95
    %1303 = vmatpush1.msra.mxu0 %v94
    %1304 = vmatprep.subr.mxu0 %v98
    %1305 = vmatpush1.msra.mxu0 %v97
    %1306 = vmatprep.subr.mxu0 %v101
    %1307 = vmatpush1.msra.mxu0 %v100
    %1308 = vmatprep.subr.mxu0 0.0
    %1309 = vmatpush1.msra.mxu0 0.0
    %1310 = vmatprep.subr.mxu0 0.0
    %1311 = vmatpush1.msra.mxu0 0.0
    %1312 = vmatprep.subr.mxu0 0.0
    %1313 = vmatpush1.msra.mxu0 0.0
    %1314 = vmatprep.subr.mxu0 0.0
    %1315 = vmatpush1.msra.mxu0 0.0
    %1316 = vmatprep.subr.mxu0 0.0
    %1317 = vmatpush1.msra.mxu0 0.0
    %1318 = vmatprep.subr.mxu0 0.0
    %1319 = vmatpush1.msra.mxu0 0.0
    %1320 = vmatprep.subr.mxu0 0.0
    %1321 = vmatpush1.msra.mxu0 0.0
    %1322 = vmatprep.subr.mxu0 0.0
    %1323 = vmatpush1.msra.mxu0 0.0
    %1324 = vmatprep.subr.mxu0 0.0
    %1325 = vmatpush1.msra.mxu0 0.0
    %1326 = vmatprep.subr.mxu0 0.0
    %1327 = vmatpush1.msra.mxu0 0.0
    %1328 = vmatprep.subr.mxu0 0.0
    %1329 = vmatpush1.msra.mxu0 0.0
    %1330 = vmatprep.subr.mxu0 0.0
    %1331 = vmatpush1.msra.mxu0 0.0
    %1332 = vmatprep.subr.mxu0 0.0
    %1333 = vmatpush1.msra.mxu0 0.0
    %1334 = vmatprep.subr.mxu0 0.0
    %1335 = vmatpush1.msra.mxu0 0.0
    %1336 = vmatprep.subr.mxu0 0.0
    %1337 = vmatpush1.msra.mxu0 0.0
    %1338 = vmatprep.subr.mxu0 0.0
    %1339 = vmatpush1.msra.mxu0 0.0
    %1340 = vmatprep.mubr.f32.mxu0 0.0
    %1341 = vmatmul.mubr.f32.gmra.mrb[0].mxu0 %v1271
    %v1342 = vpop.f32.mrb[0].mxu0
    %v1343 = vadd.f32 0.0, %v1342
    %v1344 = vpop.f32.mrb[0].mxu0
    %v1345 = vadd.f32 0.0, %v1344
    %1346 = vdwg.mxu0
    %1347 = vmatprep.subr.mxu0 0.0
    %1348 = vmatpush1.msra.mxu0 %v57
    %1349 = vmatprep.subr.mxu0 0.0
    %1350 = vmatpush1.msra.mxu0 %v60
    %1351 = vmatprep.subr.mxu0 0.0
    %1352 = vmatpush1.msra.mxu0 %v63
    %1353 = vmatprep.subr.mxu0 0.0
    %1354 = vmatpush1.msra.mxu0 %v66
    %1355 = vmatprep.subr.mxu0 0.0
    %1356 = vmatpush1.msra.mxu0 %v69
    %1357 = vmatprep.subr.mxu0 0.0
    %1358 = vmatpush1.msra.mxu0 %v72
    %1359 = vmatprep.subr.mxu0 0.0
    %1360 = vmatpush1.msra.mxu0 %v75
    %1361 = vmatprep.subr.mxu0 0.0
    %1362 = vmatpush1.msra.mxu0 %v78
    %1363 = vmatprep.subr.mxu0 0.0
    %1364 = vmatpush1.msra.mxu0 %v81
    %1365 = vmatprep.subr.mxu0 0.0
    %1366 = vmatpush1.msra.mxu0 %v84
    %1367 = vmatprep.subr.mxu0 0.0
    %1368 = vmatpush1.msra.mxu0 %v87
    %1369 = vmatprep.subr.mxu0 0.0
    %1370 = vmatpush1.msra.mxu0 %v90
    %1371 = vmatprep.subr.mxu0 0.0
    %1372 = vmatpush1.msra.mxu0 %v93
    %1373 = vmatprep.subr.mxu0 0.0
    %1374 = vmatpush1.msra.mxu0 %v96
    %1375 = vmatprep.subr.mxu0 0.0
    %1376 = vmatpush1.msra.mxu0 %v99
    %1377 = vmatprep.subr.mxu0 0.0
    %1378 = vmatpush1.msra.mxu0 %v102
    %1379 = vmatprep.subr.mxu0 0.0
    %1380 = vmatpush1.msra.mxu0 0.0
    %1381 = vmatprep.subr.mxu0 0.0
    %1382 = vmatpush1.msra.mxu0 0.0
    %1383 = vmatprep.subr.mxu0 0.0
    %1384 = vmatpush1.msra.mxu0 0.0
    %1385 = vmatprep.subr.mxu0 0.0
    %1386 = vmatpush1.msra.mxu0 0.0
    %1387 = vmatprep.subr.mxu0 0.0
    %1388 = vmatpush1.msra.mxu0 0.0
    %1389 = vmatprep.subr.mxu0 0.0
    %1390 = vmatpush1.msra.mxu0 0.0
    %1391 = vmatprep.subr.mxu0 0.0
    %1392 = vmatpush1.msra.mxu0 0.0
    %1393 = vmatprep.subr.mxu0 0.0
    %1394 = vmatpush1.msra.mxu0 0.0
    %1395 = vmatprep.subr.mxu0 0.0
    %1396 = vmatpush1.msra.mxu0 0.0
    %1397 = vmatprep.subr.mxu0 0.0
    %1398 = vmatpush1.msra.mxu0 0.0
    %1399 = vmatprep.subr.mxu0 0.0
    %1400 = vmatpush1.msra.mxu0 0.0
    %1401 = vmatprep.subr.mxu0 0.0
    %1402 = vmatpush1.msra.mxu0 0.0
    %1403 = vmatprep.subr.mxu0 0.0
    %1404 = vmatpush1.msra.mxu0 0.0
    %1405 = vmatprep.subr.mxu0 0.0
    %1406 = vmatpush1.msra.mxu0 0.0
    %1407 = vmatprep.subr.mxu0 0.0
    %1408 = vmatpush1.msra.mxu0 0.0
    %1409 = vmatprep.subr.mxu0 0.0
    %1410 = vmatpush1.msra.mxu0 0.0
    %1411 = vmatprep.mubr.f32.mxu0 0.0
    %1412 = vmatmul.mubr.f32.gmra.mrb[0].mxu0 %v1271
    %v1413 = vpop.f32.mrb[0].mxu0
    %v1414 = vadd.f32 0.0, %v1413
    %v1415 = vpop.f32.mrb[0].mxu0
    %1416 = vdwg.mxu0
    %v1417 = vadd.f32 %v1273, %v1343
    %v1418 = vxor.u32 %v1417, 2147483648
    %v1419 = vmul.f32 %v1418, 1.442695
    %v1420 = vpow.pop %v1419
    %v1421 = vadd.f32 %v1420, 1.0
    %v1422 = vrcp.pop %v1421
    %v1423 = vmul.f32 1.0, %v1422
    %v1424 = vadd.f32 %v1274, %v1345
    %v1425 = vxor.u32 %v1424, 2147483648
    %v1426 = vmul.f32 %v1425, 1.442695
    %v1427 = vpow.pop %v1426
    %v1428 = vadd.f32 %v1427, 1.0
    %v1429 = vrcp.pop %v1428
    %v1430 = vmul.f32 1.0, %v1429
    %v1431 = vadd.f32 %v1414, %v53
    %v1432 = vmul.f32 %v1423, %v1431
    %v1433 = vadd.f32 %v1275, %v1432
    %v1434 = vtanh.pop %v1433
    %v1435 = vsub.f32 1.0, %v1430
    %v1436 = vmul.f32 %v1435, %v1434
    %v1437 = vmul.f32 %v1430, %v1271
    %v1438 = vadd.f32 %v1436, %v1437
    %1439 = vst [vmem:[#allocation2] sm:$0xff] %v1438
    %1440 = vst [vmem:[#allocation8] sm:$0xff] %v1438
    // Predicated region
    $region26: #{tpu_custom_call.1} parent=1 // pred_check
      _
    $region27: #{tpu_custom_call.1} parent=1 // pred_check_branch
      %1442 = sbr.rel (0) target = $region29
    $region28: #{tpu_custom_call.1} parent=1 // pred_region
      %s1444 = ssub.s32 128, 128
      %1445 = vsyncadd [#allocation5], %s1444
      %s1447 = sshll.u32 [#allocation8], 4
      %s1448 = int_to_ptr.vmem [resolvable:$true] %s1447
      %1450 = dma.vmem_to_hbm [thread:$0]  %s1448, 128, %s3, [#allocation5]
    $region29: #{tpu_custom_call.1} parent=1 // pred_fallthru
      _
    // Predicated region
    $region30: #{tpu_custom_call.1} parent=1 // pred_check
      _
    $region31: #{tpu_custom_call.1} parent=1 // pred_check_branch
      %1452 = sbr.rel (0) target = $region33
    $region32: #{tpu_custom_call.1} parent=1 // pred_region
      %1453 = dma.done [#allocation5], 128
    $region33: #{tpu_custom_call.1} parent=1 // pred_fallthru
      _
    %1454 = vsyncpa [#allocation4], 1
    %1455 = vsyncpa [#allocation7], 1
    %1456 = vsyncpa [#allocation5], 1

</llo_original>
